<compile_context>
chip_gen: v5e
topology: v5e:2x2
jax: 0.10.0
libtpu: 0.0.40
codegen_flags: <defaults>
</compile_context>

<pallas_src>
import functools
import math

import jax
import jax.numpy as jnp
from jax.experimental import pallas as pl
from jax.experimental.pallas import tpu as pltpu

# ----------------------------- model hyper-parameters -----------------------------
N_BATCH = 2
SEQ_LEN = 8
D_MODEL = 32
N_HEADS = 4
D_HEAD = D_MODEL // N_HEADS
D_FF = 64
N_LAYERS = 2
LN_EPS = 1e-5          # torch.nn.LayerNorm default


def _layer_norm(z, g, b):
    mu = jnp.mean(z, axis=-1, keepdims=True)
    var = jnp.mean((z - mu) ** 2, axis=-1, keepdims=True)
    return (z - mu) * jax.lax.rsqrt(var + LN_EPS) * g + b


# ----------------------------------- fused kernel ----------------------------------
def encoder_block_kernel(x_ref, wqkv_ref, bqkv_ref, wo_ref, bo_ref,
                         g1_ref, beta1_ref, w1_ref, b1_ref, w2_ref, b2_ref,
                         g2_ref, beta2_ref, gf_ref, bf_ref,
                         out_ref, skips_ref, x_acc,
                         *, n_heads, d_head):
    """One (batch, layer) grid step of the fused encoder block."""
    f32, bf16 = jnp.float32, jnp.bfloat16
    layer = pl.program_id(1)
    last_layer = pl.num_programs(1) - 1

    # Load this batch's activations only on the first layer; afterwards the running
    # activations are carried in the VMEM scratch accumulator across the layer axis.
    @pl.when(layer == 0)
    def _():
        x_acc[...] = x_ref[0].astype(f32)

    x = x_acc[...]                                        # (L, D) f32
    seq, d_model = x.shape
    scale = 1.0 / math.sqrt(d_head)

    # ---- fused QKV projection (transposed): one (3D, D) @ (D, L) bf16 MXU matmul.
    # The (3D, L) orientation makes the per-head split a free sublane-aligned
    # reshape + leading-axis slices (no lane extractions, no per-head matmul loop).
    xt = x.T.astype(bf16)                                 # (D, L)
    qkv_t = jnp.dot(wqkv_ref[0], xt,
                    preferred_element_type=f32) + bqkv_ref[0]          # (3D, L) f32
    qkv_h = qkv_t.reshape(3 * n_heads, d_head, seq)       # (3H, dh, L)
    qh = qkv_h[:n_heads].astype(bf16)                     # (H, dh, L)
    kh = qkv_h[n_heads:2 * n_heads].astype(bf16)          # (H, dh, L)
    vh = qkv_h[2 * n_heads:].astype(bf16)                 # (H, dh, L)

    # ---- head-batched attention (heads are the dot_general batch dim).  This grid
    # block only sees one batch's sequence, so no cross-batch masking is needed.
    s = jnp.einsum("hdq,hdk->hqk", qh, kh,
                   preferred_element_type=f32) * scale    # (H, L, L)
    s = s - jnp.max(s, axis=-1, keepdims=True)
    p = jnp.exp(s)
    p = p / jnp.sum(p, axis=-1, keepdims=True)            # exact softmax denominator
    ctx = jnp.einsum("hqk,hdk->hqd", p.astype(bf16), vh,
                     preferred_element_type=f32)          # (H, L, dh)

    # ---- output projection: per-head row-slice of W_O, summed over heads.
    # Mathematically identical to concat(heads) @ W_O, with no relayout back.
    ctx_o = jnp.einsum("hqd,hde->hqe", ctx.astype(bf16), wo_ref[0],
                       preferred_element_type=f32)        # (H, L, D)
    attn = jnp.sum(ctx_o, axis=0) + bo_ref[0]             # (L, D)

    # ---- residual + LayerNorm 1 -------------------------------------------------
    x = _layer_norm(x + attn, g1_ref[0], beta1_ref[0])

    # ---- feed-forward (ReLU) + residual + LayerNorm 2 -----------------------------
    y = jnp.dot(x.astype(bf16), w1_ref[0], preferred_element_type=f32) + b1_ref[0]
    y = jnp.maximum(y, 0.0)
    y = jnp.dot(y.astype(bf16), w2_ref[0], preferred_element_type=f32) + b2_ref[0]
    x = _layer_norm(x + y, g2_ref[0], beta2_ref[0])

    x_acc[...] = x                                        # carry to the next layer
    skips_ref[0, 0] = x.astype(skips_ref.dtype)           # per-layer skip output

    # ---- final LayerNorm of the block (only after the last layer) -----------------
    @pl.when(layer == last_layer)
    def _():
        out_ref[0] = _layer_norm(x, gf_ref[...], bf_ref[...]).astype(out_ref.dtype)


# ------------------------------- pallas_call wrapper -------------------------------
def encoder_block_forward(x, layer_params, final_norm_params):
    """Mirrors EncoderBlock.forward: returns (x, skips)."""
    N, L, D = x.shape
    H, DH = N_HEADS, D_HEAD
    n_layers = len(layer_params)
    f32, bf16 = jnp.float32, jnp.bfloat16

    def stack(name, dtype=f32):
        return jnp.stack([p[name] for p in layer_params]).astype(dtype)

    # Weights feeding the MXU are stored bf16 (halves their VMEM/DMA footprint and
    # hits the bf16 MXU path); biases / LayerNorm affines stay f32.
    wqkv_t = jnp.stack(
        [jnp.concatenate([p["wq"], p["wk"], p["wv"]], axis=1).T
         for p in layer_params]).astype(bf16)             # (nl, 3D, D)
    bqkv_t = jnp.stack(
        [jnp.concatenate([p["bq"], p["bk"], p["bv"]], axis=1).T
         for p in layer_params]).astype(f32)              # (nl, 3D, 1)
    wo_h = jnp.stack([p["wo"].reshape(H, DH, D)
                      for p in layer_params]).astype(bf16)  # (nl, H, DH, D)
    bo = stack("bo")
    g1, beta1 = stack("g1"), stack("beta1")
    w1, b1 = stack("w1", bf16), stack("b1")
    w2, b2 = stack("w2", bf16), stack("b2")
    g2, beta2 = stack("g2"), stack("beta2")
    gf, bfin = final_norm_params
    gf, bfin = gf.astype(f32), bfin.astype(f32)

    kernel = functools.partial(encoder_block_kernel, n_heads=H, d_head=DH)

    def per_layer(*blk):
        # One layer's weight slab, streamed along the inner ("arbitrary") layer axis
        # so layer l+1 weights are auto-prefetched behind layer-l compute.
        return pl.BlockSpec((1,) + blk, lambda b, l: (l,) + (0,) * len(blk))

    in_specs = [
        pl.BlockSpec((1, L, D), lambda b, l: (b, 0, 0)),    # x (per-batch block)
        per_layer(3 * D, D),                                # fused QKV weight (T)
        per_layer(3 * D, 1),                                # fused QKV bias   (T)
        per_layer(H, DH, D),                                # W_O split per head
        per_layer(1, D),                                    # b_O
        per_layer(1, D), per_layer(1, D),                   # LN1 gamma / beta
        per_layer(D, D_FF), per_layer(1, D_FF),             # FFN W1 / b1
        per_layer(D_FF, D), per_layer(1, D),                # FFN W2 / b2
        per_layer(1, D), per_layer(1, D),                   # LN2 gamma / beta
        pl.BlockSpec((1, D), lambda b, l: (0, 0)),          # final norm gamma
        pl.BlockSpec((1, D), lambda b, l: (0, 0)),          # final norm beta
    ]
    out_specs = (
        pl.BlockSpec((1, L, D), lambda b, l: (b, 0, 0)),        # out (last layer)
        pl.BlockSpec((1, 1, L, D), lambda b, l: (l, b, 0, 0)),  # skips (every layer)
    )
    # TODO(synk): at realistic D the (·, 32)-wide out/skips stores could be reshaped
    # to a lane-dense (·, 128) slab for unmasked vst; negligible at this toy size.

    out, skips = pl.pallas_call(
        kernel,
        out_shape=(jax.ShapeDtypeStruct((N, L, D), x.dtype),
                   jax.ShapeDtypeStruct((n_layers, N, L, D), x.dtype)),
        grid=(N, n_layers),
        in_specs=in_specs,
        out_specs=out_specs,
        scratch_shapes=[pltpu.VMEM((L, D), jnp.float32)],   # running activations
        compiler_params=pltpu.CompilerParams(
            # batch axis parallel -> shards across v7x's 2 TensorCores;
            # layer axis arbitrary -> sequential carry through the scratch.
            dimension_semantics=("parallel", "arbitrary"),
            vmem_limit_bytes=32 * 1024 * 1024),
    )(x, wqkv_t, bqkv_t, wo_h, bo, g1, beta1, w1, b1, w2, b2, g2, beta2, gf, bfin)

    return out, [skips[i] for i in range(n_layers)]


# ------------------------------ deterministic parameters ----------------------------
def make_layer_params(key):
    ks = jax.random.split(key, 16)
    f32 = jnp.float32

    def nrm(k, shape, scale=0.02):
        return scale * jax.random.normal(k, shape, f32)

    return {
        "wq": nrm(ks[0], (D_MODEL, D_MODEL)), "bq": nrm(ks[1], (1, D_MODEL)),
        "wk": nrm(ks[2], (D_MODEL, D_MODEL)), "bk": nrm(ks[3], (1, D_MODEL)),
        "wv": nrm(ks[4], (D_MODEL, D_MODEL)), "bv": nrm(ks[5], (1, D_MODEL)),
        "wo": nrm(ks[6], (D_MODEL, D_MODEL)), "bo": nrm(ks[7], (1, D_MODEL)),
        "g1": 1.0 + nrm(ks[8], (1, D_MODEL), 0.1), "beta1": nrm(ks[9], (1, D_MODEL), 0.1),
        "w1": nrm(ks[10], (D_MODEL, D_FF)), "b1": nrm(ks[11], (1, D_FF)),
        "w2": nrm(ks[12], (D_FF, D_MODEL)), "b2": nrm(ks[13], (1, D_MODEL)),
        "g2": 1.0 + nrm(ks[14], (1, D_MODEL), 0.1), "beta2": nrm(ks[15], (1, D_MODEL), 0.1),
    }


# --------------------------------- pure-JAX reference -------------------------------
def _ln(x, g, b):
    mu = jnp.mean(x, axis=-1, keepdims=True)
    var = jnp.mean((x - mu) ** 2, axis=-1, keepdims=True)
    return (x - mu) / jnp.sqrt(var + LN_EPS) * g + b


def ref_layer(x, p):
    q = x @ p["wq"] + p["bq"]
    k = x @ p["wk"] + p["bk"]
    v = x @ p["wv"] + p["bv"]
    N, L, _ = x.shape
    qh = q.reshape(N, L, N_HEADS, D_HEAD).transpose(0, 2, 1, 3)
    kh = k.reshape(N, L, N_HEADS, D_HEAD).transpose(0, 2, 1, 3)
    vh = v.reshape(N, L, N_HEADS, D_HEAD).transpose(0, 2, 1, 3)
    s = jnp.einsum("nhqd,nhkd->nhqk", qh, kh) / math.sqrt(D_HEAD)
    p_attn = jax.nn.softmax(s, axis=-1)
    o = jnp.einsum("nhqk,nhkd->nhqd", p_attn, vh).transpose(0, 2, 1, 3).reshape(N, L, D_MODEL)
    x = x + (o @ p["wo"] + p["bo"])
    xn = _ln(x, p["g1"], p["beta1"])
    y = jnp.maximum(xn @ p["w1"] + p["b1"], 0.0) @ p["w2"] + p["b2"]
    return _ln(xn + y, p["g2"], p["beta2"])


def ref_block(x, layer_params, final_norm):
    skips = []
    for p in layer_params:
        x = ref_layer(x, p)
        skips.append(x)
    x = _ln(x, final_norm[0], final_norm[1])
    return x, skips


# ---------------------------------------- main ---------------------------------------
if __name__ == "__main__":
    key = jax.random.PRNGKey(0)
    kx, kg, kb, *layer_keys = jax.random.split(key, N_LAYERS + 3)

    x = jax.random.normal(kx, (N_BATCH, SEQ_LEN, D_MODEL), jnp.float32)
    layer_params = [make_layer_params(k) for k in layer_keys]
    final_norm = (1.0 + 0.1 * jax.random.normal(kg, (1, D_MODEL), jnp.float32),
                  0.1 * jax.random.normal(kb, (1, D_MODEL), jnp.float32))

    forward = jax.jit(encoder_block_forward)
    out, skips = forward(x, layer_params, final_norm)
    out = jax.block_until_ready(out)
    skips = [jax.block_until_ready(s) for s in skips]

    # correctness check against pure-JAX f32 reference (kernel uses bf16 MXU operands,
    # hence the slightly relaxed tolerance).
    ref_out, ref_skips = ref_block(x, layer_params, final_norm)
    assert out.shape == (N_BATCH, SEQ_LEN, D_MODEL)
    assert len(skips) == N_LAYERS
    assert jnp.allclose(out, ref_out, atol=5e-3, rtol=5e-3)
    for s, rs in zip(skips, ref_skips):
        assert jnp.allclose(s, rs, atol=5e-3, rtol=5e-3)

    print("KERNEL_OK")
</pallas_src>

<mosaic_0001>
module attributes {stable_mosaic.version = 11 : i64} {
  func.func @encoder_block_kernel(%arg0: i32, %arg1: i32, %arg2: memref<1x8x32xf32, #tpu.memory_space<vmem>>, %arg3: memref<1x96x32xbf16, #tpu.memory_space<vmem>>, %arg4: memref<1x96x1xf32, #tpu.memory_space<vmem>>, %arg5: memref<1x4x8x32xbf16, #tpu.memory_space<vmem>>, %arg6: memref<1x1x32xf32, #tpu.memory_space<vmem>>, %arg7: memref<1x1x32xf32, #tpu.memory_space<vmem>>, %arg8: memref<1x1x32xf32, #tpu.memory_space<vmem>>, %arg9: memref<1x32x64xbf16, #tpu.memory_space<vmem>>, %arg10: memref<1x1x64xf32, #tpu.memory_space<vmem>>, %arg11: memref<1x64x32xbf16, #tpu.memory_space<vmem>>, %arg12: memref<1x1x32xf32, #tpu.memory_space<vmem>>, %arg13: memref<1x1x32xf32, #tpu.memory_space<vmem>>, %arg14: memref<1x1x32xf32, #tpu.memory_space<vmem>>, %arg15: memref<1x32xf32, #tpu.memory_space<vmem>>, %arg16: memref<1x32xf32, #tpu.memory_space<vmem>>, %arg17: memref<1x8x32xf32, #tpu.memory_space<vmem>>, %arg18: memref<1x1x8x32xf32, #tpu.memory_space<vmem>>, %arg19: memref<8x32xf32, #tpu.memory_space<vmem>>) attributes {dimension_semantics = [#tpu.dimension_semantics<parallel>, #tpu.dimension_semantics<arbitrary>], iteration_bounds = array<i64: 2, 2>, scalar_prefetch = 0 : i64, scratch_operands = 1 : i64, tpu.core_type = #tpu.core_type<tc>, window_params = [{transform_indices = @transform_0, window_bounds = array<i64: 1, 8, 32>}, {transform_indices = @transform_1, window_bounds = array<i64: 1, 96, 32>}, {transform_indices = @transform_2, window_bounds = array<i64: 1, 96, 1>}, {transform_indices = @transform_3, window_bounds = array<i64: 1, 4, 8, 32>}, {transform_indices = @transform_4, window_bounds = array<i64: 1, 1, 32>}, {transform_indices = @transform_5, window_bounds = array<i64: 1, 1, 32>}, {transform_indices = @transform_6, window_bounds = array<i64: 1, 1, 32>}, {transform_indices = @transform_7, window_bounds = array<i64: 1, 32, 64>}, {transform_indices = @transform_8, window_bounds = array<i64: 1, 1, 64>}, {transform_indices = @transform_9, window_bounds = array<i64: 1, 64, 32>}, {transform_indices = @transform_10, window_bounds = array<i64: 1, 1, 32>}, {transform_indices = @transform_11, window_bounds = array<i64: 1, 1, 32>}, {transform_indices = @transform_12, window_bounds = array<i64: 1, 1, 32>}, {pipeline_mode = #tpu.pipeline_mode<synchronous>, transform_indices = @transform_13, window_bounds = array<i64: 1, 32>}, {pipeline_mode = #tpu.pipeline_mode<synchronous>, transform_indices = @transform_14, window_bounds = array<i64: 1, 32>}, {transform_indices = @transform_15, window_bounds = array<i64: 1, 8, 32>}, {transform_indices = @transform_16, window_bounds = array<i64: 1, 1, 8, 32>}]} {
    %c0_i32 = arith.constant 0 : i32
    %0 = arith.cmpi eq, %arg1, %c0_i32 : i32
    %1 = arith.extui %0 : i1 to i32
    %c0_i32_0 = arith.constant 0 : i32
    %2 = arith.cmpi ne, %1, %c0_i32_0 : i32
    scf.if %2 {
      %c0_66 = arith.constant 0 : index
      %c0_67 = arith.constant 0 : index
      %c0_68 = arith.constant 0 : index
      %122 = vector.load %arg2[%c0_66, %c0_67, %c0_68] : memref<1x8x32xf32, #tpu.memory_space<vmem>>, vector<1x8x32xf32>
      %123 = vector.shape_cast %122 : vector<1x8x32xf32> to vector<8x32xf32>
      %c0_69 = arith.constant 0 : index
      %c0_70 = arith.constant 0 : index
      %124 = vector.load %arg19[%c0_69, %c0_70] : memref<8x32xf32, #tpu.memory_space<vmem>>, vector<8x32xf32>
      tpu.vector_store %arg19[%c0_69, %c0_70], %123 {strides = array<i32>} : memref<8x32xf32, #tpu.memory_space<vmem>>, vector<8x32xf32>,
    } else {
    }
    %c0 = arith.constant 0 : index
    %c0_1 = arith.constant 0 : index
    %3 = vector.load %arg19[%c0, %c0_1] : memref<8x32xf32, #tpu.memory_space<vmem>>, vector<8x32xf32>
    %4 = tpu.transpose %3, [1, 0] : vector<8x32xf32> -> vector<32x8xf32>
    %5 = arith.truncf %4 : vector<32x8xf32> to vector<32x8xbf16>
    %c0_2 = arith.constant 0 : index
    %c0_3 = arith.constant 0 : index
    %c0_4 = arith.constant 0 : index
    %6 = vector.load %arg3[%c0_2, %c0_3, %c0_4] : memref<1x96x32xbf16, #tpu.memory_space<vmem>>, vector<1x96x32xbf16>
    %7 = vector.shape_cast %6 : vector<1x96x32xbf16> to vector<96x32xbf16>
    %cst = arith.constant dense<0.000000e+00> : vector<96x8xf32>
    %8 = tpu.matmul %7, %5, %cst {dimension_numbers = #tpu.dot_dimension_numbers<[1], [0], [0], [1], [0, 0, 1, 1], [], []>} : vector<96x32xbf16>, vector<32x8xbf16>, vector<96x8xf32> -> vector<96x8xf32>
    %c0_5 = arith.constant 0 : index
    %c0_6 = arith.constant 0 : index
    %c0_7 = arith.constant 0 : index
    %9 = vector.load %arg4[%c0_5, %c0_6, %c0_7] : memref<1x96x1xf32, #tpu.memory_space<vmem>>, vector<1x96x1xf32>
    %10 = vector.shape_cast %9 : vector<1x96x1xf32> to vector<96x1xf32>
    %11 = vector.broadcast %10 : vector<96x1xf32> to vector<96x8xf32>
    %12 = arith.addf %8, %11 : vector<96x8xf32>
    %13 = vector.shape_cast %12 : vector<96x8xf32> to vector<12x8x8xf32>
    %14 = vector.extract_strided_slice %13 {offsets = [0, 0, 0], sizes = [4, 8, 8], strides = [1, 1, 1]} : vector<12x8x8xf32> to vector<4x8x8xf32>
    %15 = arith.truncf %14 : vector<4x8x8xf32> to vector<4x8x8xbf16>
    %16 = vector.extract_strided_slice %13 {offsets = [4, 0, 0], sizes = [4, 8, 8], strides = [1, 1, 1]} : vector<12x8x8xf32> to vector<4x8x8xf32>
    %17 = arith.truncf %16 : vector<4x8x8xf32> to vector<4x8x8xbf16>
    %18 = vector.extract_strided_slice %13 {offsets = [8, 0, 0], sizes = [4, 8, 8], strides = [1, 1, 1]} : vector<12x8x8xf32> to vector<4x8x8xf32>
    %19 = arith.truncf %18 : vector<4x8x8xf32> to vector<4x8x8xbf16>
    "tpu.trace_start"() <{level = 10 : i32, message = "hdq,hdk->hqk"}> : () -> ()
    %cst_8 = arith.constant dense<0.000000e+00> : vector<4x8x8xf32>
    %20 = tpu.matmul %15, %17, %cst_8 {dimension_numbers = #tpu.dot_dimension_numbers<[1], [1], [2], [2], [0, 0, 0, 2, 1, 2], [0], [0]>} : vector<4x8x8xbf16>, vector<4x8x8xbf16>, vector<4x8x8xf32> -> vector<4x8x8xf32>
    "tpu.trace_stop"() : () -> ()
    %cst_9 = arith.constant 0.353553385 : f32
    %21 = vector.broadcast %cst_9 : f32 to vector<4x8x8xf32>
    %22 = arith.mulf %20, %21 : vector<4x8x8xf32>
    %cst_10 = arith.constant dense<0xFF800000> : vector<4x8xf32>
    %23 = vector.multi_reduction <maximumf>, %22, %cst_10 [2] : vector<4x8x8xf32> to vector<4x8xf32>
    %24 = vector.shape_cast %23 : vector<4x8xf32> to vector<4x8x1xf32>
    %25 = vector.broadcast %24 : vector<4x8x1xf32> to vector<4x8x8xf32>
    %26 = arith.subf %22, %25 : vector<4x8x8xf32>
    %27 = math.exp %26 : vector<4x8x8xf32>
    %cst_11 = arith.constant dense<0.000000e+00> : vector<4x8xf32>
    %28 = vector.multi_reduction <add>, %27, %cst_11 [2] : vector<4x8x8xf32> to vector<4x8xf32>
    %29 = vector.shape_cast %28 : vector<4x8xf32> to vector<4x8x1xf32>
    %30 = vector.broadcast %29 : vector<4x8x1xf32> to vector<4x8x8xf32>
    %31 = arith.divf %27, %30 : vector<4x8x8xf32>
    %32 = arith.truncf %31 : vector<4x8x8xf32> to vector<4x8x8xbf16>
    "tpu.trace_start"() <{level = 10 : i32, message = "hqk,hdk->hqd"}> : () -> ()
    %cst_12 = arith.constant dense<0.000000e+00> : vector<4x8x8xf32>
    %33 = tpu.matmul %32, %19, %cst_12 {dimension_numbers = #tpu.dot_dimension_numbers<[2], [2], [1], [1], [0, 0, 0, 1, 1, 1], [0], [0]>} : vector<4x8x8xbf16>, vector<4x8x8xbf16>, vector<4x8x8xf32> -> vector<4x8x8xf32>
    "tpu.trace_stop"() : () -> ()
    %34 = arith.truncf %33 : vector<4x8x8xf32> to vector<4x8x8xbf16>
    %c0_13 = arith.constant 0 : index
    %c0_14 = arith.constant 0 : index
    %c0_15 = arith.constant 0 : index
    %c0_16 = arith.constant 0 : index
    %35 = vector.load %arg5[%c0_13, %c0_14, %c0_15, %c0_16] : memref<1x4x8x32xbf16, #tpu.memory_space<vmem>>, vector<1x4x8x32xbf16>
    %36 = vector.shape_cast %35 : vector<1x4x8x32xbf16> to vector<4x8x32xbf16>
    "tpu.trace_start"() <{level = 10 : i32, message = "hqd,hde->hqe"}> : () -> ()
    %cst_17 = arith.constant dense<0.000000e+00> : vector<4x8x32xf32>
    %37 = tpu.matmul %34, %36, %cst_17 {dimension_numbers = #tpu.dot_dimension_numbers<[2], [1], [1], [2], [0, 0, 0, 1, 1, 2], [0], [0]>} : vector<4x8x8xbf16>, vector<4x8x32xbf16>, vector<4x8x32xf32> -> vector<4x8x32xf32>
    "tpu.trace_stop"() : () -> ()
    %cst_18 = arith.constant dense<0.000000e+00> : vector<8x32xf32>
    %38 = vector.multi_reduction <add>, %37, %cst_18 [0] : vector<4x8x32xf32> to vector<8x32xf32>
    %c0_19 = arith.constant 0 : index
    %c0_20 = arith.constant 0 : index
    %c0_21 = arith.constant 0 : index
    %39 = vector.load %arg6[%c0_19, %c0_20, %c0_21] : memref<1x1x32xf32, #tpu.memory_space<vmem>>, vector<1x1x32xf32>
    %40 = vector.shape_cast %39 : vector<1x1x32xf32> to vector<1x32xf32>
    %41 = vector.broadcast %40 : vector<1x32xf32> to vector<8x32xf32>
    %42 = arith.addf %38, %41 : vector<8x32xf32>
    %43 = arith.addf %3, %42 : vector<8x32xf32>
    %c0_22 = arith.constant 0 : index
    %c0_23 = arith.constant 0 : index
    %c0_24 = arith.constant 0 : index
    %44 = vector.load %arg7[%c0_22, %c0_23, %c0_24] : memref<1x1x32xf32, #tpu.memory_space<vmem>>, vector<1x1x32xf32>
    %45 = vector.shape_cast %44 : vector<1x1x32xf32> to vector<1x32xf32>
    %c0_25 = arith.constant 0 : index
    %c0_26 = arith.constant 0 : index
    %c0_27 = arith.constant 0 : index
    %46 = vector.load %arg8[%c0_25, %c0_26, %c0_27] : memref<1x1x32xf32, #tpu.memory_space<vmem>>, vector<1x1x32xf32>
    %47 = vector.shape_cast %46 : vector<1x1x32xf32> to vector<1x32xf32>
    %cst_28 = arith.constant dense<0.000000e+00> : vector<8xf32>
    %48 = vector.multi_reduction <add>, %43, %cst_28 [1] : vector<8x32xf32> to vector<8xf32>
    %49 = vector.shape_cast %48 : vector<8xf32> to vector<8x1xf32>
    %cst_29 = arith.constant 3.200000e+01 : f32
    %50 = vector.broadcast %cst_29 : f32 to vector<8x1xf32>
    %51 = arith.divf %49, %50 : vector<8x1xf32>
    %52 = vector.broadcast %51 : vector<8x1xf32> to vector<8x32xf32>
    %53 = arith.subf %43, %52 : vector<8x32xf32>
    %54 = arith.mulf %53, %53 : vector<8x32xf32>
    %cst_30 = arith.constant dense<0.000000e+00> : vector<8xf32>
    %55 = vector.multi_reduction <add>, %54, %cst_30 [1] : vector<8x32xf32> to vector<8xf32>
    %56 = vector.shape_cast %55 : vector<8xf32> to vector<8x1xf32>
    %cst_31 = arith.constant 3.200000e+01 : f32
    %57 = vector.broadcast %cst_31 : f32 to vector<8x1xf32>
    %58 = arith.divf %56, %57 : vector<8x1xf32>
    %59 = vector.broadcast %51 : vector<8x1xf32> to vector<8x32xf32>
    %60 = arith.subf %43, %59 : vector<8x32xf32>
    %cst_32 = arith.constant 9.99999974E-6 : f32
    %61 = vector.broadcast %cst_32 : f32 to vector<8x1xf32>
    %62 = arith.addf %58, %61 : vector<8x1xf32>
    %63 = math.rsqrt %62 : vector<8x1xf32>
    %64 = vector.broadcast %63 : vector<8x1xf32> to vector<8x32xf32>
    %65 = arith.mulf %60, %64 : vector<8x32xf32>
    %66 = vector.broadcast %45 : vector<1x32xf32> to vector<8x32xf32>
    %67 = arith.mulf %65, %66 : vector<8x32xf32>
    %68 = vector.broadcast %47 : vector<1x32xf32> to vector<8x32xf32>
    %69 = arith.addf %67, %68 : vector<8x32xf32>
    %70 = arith.truncf %69 : vector<8x32xf32> to vector<8x32xbf16>
    %c0_33 = arith.constant 0 : index
    %c0_34 = arith.constant 0 : index
    %c0_35 = arith.constant 0 : index
    %71 = vector.load %arg9[%c0_33, %c0_34, %c0_35] : memref<1x32x64xbf16, #tpu.memory_space<vmem>>, vector<1x32x64xbf16>
    %72 = vector.shape_cast %71 : vector<1x32x64xbf16> to vector<32x64xbf16>
    %cst_36 = arith.constant dense<0.000000e+00> : vector<8x64xf32>
    %73 = tpu.matmul %70, %72, %cst_36 {dimension_numbers = #tpu.dot_dimension_numbers<[1], [0], [0], [1], [0, 0, 1, 1], [], []>} : vector<8x32xbf16>, vector<32x64xbf16>, vector<8x64xf32> -> vector<8x64xf32>
    %c0_37 = arith.constant 0 : index
    %c0_38 = arith.constant 0 : index
    %c0_39 = arith.constant 0 : index
    %74 = vector.load %arg10[%c0_37, %c0_38, %c0_39] : memref<1x1x64xf32, #tpu.memory_space<vmem>>, vector<1x1x64xf32>
    %75 = vector.shape_cast %74 : vector<1x1x64xf32> to vector<1x64xf32>
    %76 = vector.broadcast %75 : vector<1x64xf32> to vector<8x64xf32>
    %77 = arith.addf %73, %76 : vector<8x64xf32>
    %cst_40 = arith.constant 0.000000e+00 : f32
    %78 = vector.broadcast %cst_40 : f32 to vector<8x64xf32>
    %79 = arith.maximumf %77, %78 : vector<8x64xf32>
    %80 = arith.truncf %79 : vector<8x64xf32> to vector<8x64xbf16>
    %c0_41 = arith.constant 0 : index
    %c0_42 = arith.constant 0 : index
    %c0_43 = arith.constant 0 : index
    %81 = vector.load %arg11[%c0_41, %c0_42, %c0_43] : memref<1x64x32xbf16, #tpu.memory_space<vmem>>, vector<1x64x32xbf16>
    %82 = vector.shape_cast %81 : vector<1x64x32xbf16> to vector<64x32xbf16>
    %cst_44 = arith.constant dense<0.000000e+00> : vector<8x32xf32>
    %83 = tpu.matmul %80, %82, %cst_44 {dimension_numbers = #tpu.dot_dimension_numbers<[1], [0], [0], [1], [0, 0, 1, 1], [], []>} : vector<8x64xbf16>, vector<64x32xbf16>, vector<8x32xf32> -> vector<8x32xf32>
    %c0_45 = arith.constant 0 : index
    %c0_46 = arith.constant 0 : index
    %c0_47 = arith.constant 0 : index
    %84 = vector.load %arg12[%c0_45, %c0_46, %c0_47] : memref<1x1x32xf32, #tpu.memory_space<vmem>>, vector<1x1x32xf32>
    %85 = vector.shape_cast %84 : vector<1x1x32xf32> to vector<1x32xf32>
    %86 = vector.broadcast %85 : vector<1x32xf32> to vector<8x32xf32>
    %87 = arith.addf %83, %86 : vector<8x32xf32>
    %88 = arith.addf %69, %87 : vector<8x32xf32>
    %c0_48 = arith.constant 0 : index
    %c0_49 = arith.constant 0 : index
    %c0_50 = arith.constant 0 : index
    %89 = vector.load %arg13[%c0_48, %c0_49, %c0_50] : memref<1x1x32xf32, #tpu.memory_space<vmem>>, vector<1x1x32xf32>
    %90 = vector.shape_cast %89 : vector<1x1x32xf32> to vector<1x32xf32>
    %c0_51 = arith.constant 0 : index
    %c0_52 = arith.constant 0 : index
    %c0_53 = arith.constant 0 : index
    %91 = vector.load %arg14[%c0_51, %c0_52, %c0_53] : memref<1x1x32xf32, #tpu.memory_space<vmem>>, vector<1x1x32xf32>
    %92 = vector.shape_cast %91 : vector<1x1x32xf32> to vector<1x32xf32>
    %cst_54 = arith.constant dense<0.000000e+00> : vector<8xf32>
    %93 = vector.multi_reduction <add>, %88, %cst_54 [1] : vector<8x32xf32> to vector<8xf32>
    %94 = vector.shape_cast %93 : vector<8xf32> to vector<8x1xf32>
    %cst_55 = arith.constant 3.200000e+01 : f32
    %95 = vector.broadcast %cst_55 : f32 to vector<8x1xf32>
    %96 = arith.divf %94, %95 : vector<8x1xf32>
    %97 = vector.broadcast %96 : vector<8x1xf32> to vector<8x32xf32>
    %98 = arith.subf %88, %97 : vector<8x32xf32>
    %99 = arith.mulf %98, %98 : vector<8x32xf32>
    %cst_56 = arith.constant dense<0.000000e+00> : vector<8xf32>
    %100 = vector.multi_reduction <add>, %99, %cst_56 [1] : vector<8x32xf32> to vector<8xf32>
    %101 = vector.shape_cast %100 : vector<8xf32> to vector<8x1xf32>
    %cst_57 = arith.constant 3.200000e+01 : f32
    %102 = vector.broadcast %cst_57 : f32 to vector<8x1xf32>
    %103 = arith.divf %101, %102 : vector<8x1xf32>
    %104 = vector.broadcast %96 : vector<8x1xf32> to vector<8x32xf32>
    %105 = arith.subf %88, %104 : vector<8x32xf32>
    %cst_58 = arith.constant 9.99999974E-6 : f32
    %106 = vector.broadcast %cst_58 : f32 to vector<8x1xf32>
    %107 = arith.addf %103, %106 : vector<8x1xf32>
    %108 = math.rsqrt %107 : vector<8x1xf32>
    %109 = vector.broadcast %108 : vector<8x1xf32> to vector<8x32xf32>
    %110 = arith.mulf %105, %109 : vector<8x32xf32>
    %111 = vector.broadcast %90 : vector<1x32xf32> to vector<8x32xf32>
    %112 = arith.mulf %110, %111 : vector<8x32xf32>
    %113 = vector.broadcast %92 : vector<1x32xf32> to vector<8x32xf32>
    %114 = arith.addf %112, %113 : vector<8x32xf32>
    %c0_59 = arith.constant 0 : index
    %c0_60 = arith.constant 0 : index
    %115 = vector.load %arg19[%c0_59, %c0_60] : memref<8x32xf32, #tpu.memory_space<vmem>>, vector<8x32xf32>
    tpu.vector_store %arg19[%c0_59, %c0_60], %114 {strides = array<i32>} : memref<8x32xf32, #tpu.memory_space<vmem>>, vector<8x32xf32>,
    %c0_61 = arith.constant 0 : index
    %c0_62 = arith.constant 0 : index
    %c0_63 = arith.constant 0 : index
    %c0_64 = arith.constant 0 : index
    %116 = vector.load %arg18[%c0_61, %c0_62, %c0_63, %c0_64] : memref<1x1x8x32xf32, #tpu.memory_space<vmem>>, vector<1x1x8x32xf32>
    %117 = vector.shape_cast %116 : vector<1x1x8x32xf32> to vector<8x32xf32>
    %118 = vector.shape_cast %114 : vector<8x32xf32> to vector<1x1x8x32xf32>
    tpu.vector_store %arg18[%c0_61, %c0_62, %c0_63, %c0_64], %118 {strides = array<i32>} : memref<1x1x8x32xf32, #tpu.memory_space<vmem>>, vector<1x1x8x32xf32>,
    %c1_i32 = arith.constant 1 : i32
    %119 = arith.cmpi eq, %arg1, %c1_i32 : i32
    %120 = arith.extui %119 : i1 to i32
    %c0_i32_65 = arith.constant 0 : i32
    %121 = arith.cmpi ne, %120, %c0_i32_65 : i32
    scf.if %121 {
      %c0_66 = arith.constant 0 : index
      %c0_67 = arith.constant 0 : index
      %122 = vector.load %arg15[%c0_66, %c0_67] : memref<1x32xf32, #tpu.memory_space<vmem>>, vector<1x32xf32>
      %c0_68 = arith.constant 0 : index
      %c0_69 = arith.constant 0 : index
      %123 = vector.load %arg16[%c0_68, %c0_69] : memref<1x32xf32, #tpu.memory_space<vmem>>, vector<1x32xf32>
      %cst_70 = arith.constant dense<0.000000e+00> : vector<8xf32>
      %124 = vector.multi_reduction <add>, %114, %cst_70 [1] : vector<8x32xf32> to vector<8xf32>
      %125 = vector.shape_cast %124 : vector<8xf32> to vector<8x1xf32>
      %cst_71 = arith.constant 3.200000e+01 : f32
      %126 = vector.broadcast %cst_71 : f32 to vector<8x1xf32>
      %127 = arith.divf %125, %126 : vector<8x1xf32>
      %128 = vector.broadcast %127 : vector<8x1xf32> to vector<8x32xf32>
      %129 = arith.subf %114, %128 : vector<8x32xf32>
      %130 = arith.mulf %129, %129 : vector<8x32xf32>
      %cst_72 = arith.constant dense<0.000000e+00> : vector<8xf32>
      %131 = vector.multi_reduction <add>, %130, %cst_72 [1] : vector<8x32xf32> to vector<8xf32>
      %132 = vector.shape_cast %131 : vector<8xf32> to vector<8x1xf32>
      %cst_73 = arith.constant 3.200000e+01 : f32
      %133 = vector.broadcast %cst_73 : f32 to vector<8x1xf32>
      %134 = arith.divf %132, %133 : vector<8x1xf32>
      %135 = vector.broadcast %127 : vector<8x1xf32> to vector<8x32xf32>
      %136 = arith.subf %114, %135 : vector<8x32xf32>
      %cst_74 = arith.constant 9.99999974E-6 : f32
      %137 = vector.broadcast %cst_74 : f32 to vector<8x1xf32>
      %138 = arith.addf %134, %137 : vector<8x1xf32>
      %139 = math.rsqrt %138 : vector<8x1xf32>
      %140 = vector.broadcast %139 : vector<8x1xf32> to vector<8x32xf32>
      %141 = arith.mulf %136, %140 : vector<8x32xf32>
      %142 = vector.broadcast %122 : vector<1x32xf32> to vector<8x32xf32>
      %143 = arith.mulf %141, %142 : vector<8x32xf32>
      %144 = vector.broadcast %123 : vector<1x32xf32> to vector<8x32xf32>
      %145 = arith.addf %143, %144 : vector<8x32xf32>
      %c0_75 = arith.constant 0 : index
      %c0_76 = arith.constant 0 : index
      %c0_77 = arith.constant 0 : index
      %146 = vector.load %arg17[%c0_75, %c0_76, %c0_77] : memref<1x8x32xf32, #tpu.memory_space<vmem>>, vector<1x8x32xf32>
      %147 = vector.shape_cast %146 : vector<1x8x32xf32> to vector<8x32xf32>
      %148 = vector.shape_cast %145 : vector<8x32xf32> to vector<1x8x32xf32>
      tpu.vector_store %arg17[%c0_75, %c0_76, %c0_77], %148 {strides = array<i32>} : memref<1x8x32xf32, #tpu.memory_space<vmem>>, vector<1x8x32xf32>,
    } else {
    }
    return
  }
  func.func @transform_0(%arg0: i32, %arg1: i32) -> (i32, i32, i32) {
    %c0_i32 = arith.constant 0 : i32
    %c0_i32_0 = arith.constant 0 : i32
    %c0_i32_1 = arith.constant 0 : i32
    return %arg0, %c0_i32, %c0_i32_0 : i32, i32, i32
  }
  func.func @transform_1(%arg0: i32, %arg1: i32) -> (i32, i32, i32) {
    %c0_i32 = arith.constant 0 : i32
    %c0_i32_0 = arith.constant 0 : i32
    %c0_i32_1 = arith.constant 0 : i32
    return %arg1, %c0_i32, %c0_i32_0 : i32, i32, i32
  }
  func.func @transform_2(%arg0: i32, %arg1: i32) -> (i32, i32, i32) {
    %c0_i32 = arith.constant 0 : i32
    %c0_i32_0 = arith.constant 0 : i32
    %c0_i32_1 = arith.constant 0 : i32
    return %arg1, %c0_i32, %c0_i32_0 : i32, i32, i32
  }
  func.func @transform_3(%arg0: i32, %arg1: i32) -> (i32, i32, i32, i32) {
    %c0_i32 = arith.constant 0 : i32
    %c0_i32_0 = arith.constant 0 : i32
    %c0_i32_1 = arith.constant 0 : i32
    %c0_i32_2 = arith.constant 0 : i32
    return %arg1, %c0_i32, %c0_i32_0, %c0_i32_1 : i32, i32, i32, i32
  }
  func.func @transform_4(%arg0: i32, %arg1: i32) -> (i32, i32, i32) {
    %c0_i32 = arith.constant 0 : i32
    %c0_i32_0 = arith.constant 0 : i32
    %c0_i32_1 = arith.constant 0 : i32
    return %arg1, %c0_i32, %c0_i32_0 : i32, i32, i32
  }
  func.func @transform_5(%arg0: i32, %arg1: i32) -> (i32, i32, i32) {
    %c0_i32 = arith.constant 0 : i32
    %c0_i32_0 = arith.constant 0 : i32
    %c0_i32_1 = arith.constant 0 : i32
    return %arg1, %c0_i32, %c0_i32_0 : i32, i32, i32
  }
  func.func @transform_6(%arg0: i32, %arg1: i32) -> (i32, i32, i32) {
    %c0_i32 = arith.constant 0 : i32
    %c0_i32_0 = arith.constant 0 : i32
    %c0_i32_1 = arith.constant 0 : i32
    return %arg1, %c0_i32, %c0_i32_0 : i32, i32, i32
  }
  func.func @transform_7(%arg0: i32, %arg1: i32) -> (i32, i32, i32) {
    %c0_i32 = arith.constant 0 : i32
    %c0_i32_0 = arith.constant 0 : i32
    %c0_i32_1 = arith.constant 0 : i32
    return %arg1, %c0_i32, %c0_i32_0 : i32, i32, i32
  }
  func.func @transform_8(%arg0: i32, %arg1: i32) -> (i32, i32, i32) {
    %c0_i32 = arith.constant 0 : i32
    %c0_i32_0 = arith.constant 0 : i32
    %c0_i32_1 = arith.constant 0 : i32
    return %arg1, %c0_i32, %c0_i32_0 : i32, i32, i32
  }
  func.func @transform_9(%arg0: i32, %arg1: i32) -> (i32, i32, i32) {
    %c0_i32 = arith.constant 0 : i32
    %c0_i32_0 = arith.constant 0 : i32
    %c0_i32_1 = arith.constant 0 : i32
    return %arg1, %c0_i32, %c0_i32_0 : i32, i32, i32
  }
  func.func @transform_10(%arg0: i32, %arg1: i32) -> (i32, i32, i32) {
    %c0_i32 = arith.constant 0 : i32
    %c0_i32_0 = arith.constant 0 : i32
    %c0_i32_1 = arith.constant 0 : i32
    return %arg1, %c0_i32, %c0_i32_0 : i32, i32, i32
  }
  func.func @transform_11(%arg0: i32, %arg1: i32) -> (i32, i32, i32) {
    %c0_i32 = arith.constant 0 : i32
    %c0_i32_0 = arith.constant 0 : i32
    %c0_i32_1 = arith.constant 0 : i32
    return %arg1, %c0_i32, %c0_i32_0 : i32, i32, i32
  }
  func.func @transform_12(%arg0: i32, %arg1: i32) -> (i32, i32, i32) {
    %c0_i32 = arith.constant 0 : i32
    %c0_i32_0 = arith.constant 0 : i32
    %c0_i32_1 = arith.constant 0 : i32
    return %arg1, %c0_i32, %c0_i32_0 : i32, i32, i32
  }
  func.func @transform_13(%arg0: i32, %arg1: i32) -> (i32, i32) {
    %c0_i32 = arith.constant 0 : i32
    %c0_i32_0 = arith.constant 0 : i32
    %c0_i32_1 = arith.constant 0 : i32
    return %c0_i32, %c0_i32_0 : i32, i32
  }
  func.func @transform_14(%arg0: i32, %arg1: i32) -> (i32, i32) {
    %c0_i32 = arith.constant 0 : i32
    %c0_i32_0 = arith.constant 0 : i32
    %c0_i32_1 = arith.constant 0 : i32
    return %c0_i32, %c0_i32_0 : i32, i32
  }
  func.func @transform_15(%arg0: i32, %arg1: i32) -> (i32, i32, i32) {
    %c0_i32 = arith.constant 0 : i32
    %c0_i32_0 = arith.constant 0 : i32
    %c0_i32_1 = arith.constant 0 : i32
    return %arg0, %c0_i32, %c0_i32_0 : i32, i32, i32
  }
  func.func @transform_16(%arg0: i32, %arg1: i32) -> (i32, i32, i32, i32) {
    %c0_i32 = arith.constant 0 : i32
    %c0_i32_0 = arith.constant 0 : i32
    %c0_i32_1 = arith.constant 0 : i32
    return %arg1, %arg0, %c0_i32, %c0_i32_0 : i32, i32, i32, i32
  }
}

</mosaic_0001>

<llo_original>
// kernel: encoder_block_forward.1
$region0: #{encoder_block_forward.1}
  #allocation0 [shape = 'u32[]', space=smem, size = 0x4, offset = 0x4, fixed_abs, tag = 'smem constant byte address 0x4 - core index']
  #allocation1 [shape = 'u32[72,128]{1,0:T(1,128)}', space=vmem, size = 0x9000, scoped, tag = 'internal scratch']
  #allocation2 [shape = 'f32[8,32]{1,0:T(8,128)}', space=vmem, size = 0x1000, scoped, tag = 'scratch operand']
  %s0 = inlined_call_operand.vmem [shape: f32[2,8,32], index: 0, kind: input, shape index: {}]
  %s1 = inlined_call_operand.vmem [shape: bf16[2,96,32], index: 1, kind: input, shape index: {}]
  %s2 = inlined_call_operand.vmem [shape: f32[2,96,1], index: 2, kind: input, shape index: {}]
  %s3 = inlined_call_operand.vmem [shape: bf16[2,4,8,32], index: 3, kind: input, shape index: {}]
  %s4 = inlined_call_operand.vmem [shape: f32[2,1,32], index: 4, kind: input, shape index: {}]
  %s5 = inlined_call_operand.vmem [shape: f32[2,1,32], index: 5, kind: input, shape index: {}]
  %s6 = inlined_call_operand.vmem [shape: f32[2,1,32], index: 6, kind: input, shape index: {}]
  %s7 = inlined_call_operand.vmem [shape: bf16[2,32,64], index: 7, kind: input, shape index: {}]
  %s8 = inlined_call_operand.vmem [shape: f32[2,1,64], index: 8, kind: input, shape index: {}]
  %s9 = inlined_call_operand.vmem [shape: bf16[2,64,32], index: 9, kind: input, shape index: {}]
  %s10 = inlined_call_operand.vmem [shape: f32[2,1,32], index: 10, kind: input, shape index: {}]
  %s11 = inlined_call_operand.vmem [shape: f32[2,1,32], index: 11, kind: input, shape index: {}]
  %s12 = inlined_call_operand.vmem [shape: f32[2,1,32], index: 12, kind: input, shape index: {}]
  %s13 = inlined_call_operand.vmem [shape: f32[1,32], index: 13, kind: input, shape index: {}]
  %s14 = inlined_call_operand.vmem [shape: f32[1,32], index: 14, kind: input, shape index: {}]
  %s15 = inlined_call_operand.hbm [shape: f32[2,8,32], index: 15, kind: output, shape index: {0}]
  %s16 = inlined_call_operand.vmem [shape: f32[2,2,8,32], index: 16, kind: output, shape index: {1}]
  %17 = xla_tuple %s15, %s16
  %s18 = sld [smem:[#allocation0]]
  $region109: #{encoder_block_forward.1} parent=0
    _
  %s20 = ssub.s32 1, %s18
  %s21 = scalar_select 0, %s20, %s18
  $region1: #{encoder_block_forward.1} parent=0
    #allocation3 [shape = 'u8[8192]{0}', space=vmem, size = 0x2000, scoped, tag = 'output window, operand 0']
    #allocation4 [shape = 's32[2]{0}', space=sflag, size = 0x8, scoped, tag = 'scoped memory for encoder_block_forward.1']
    %22 = vsyncpa [#allocation4], 0
    %s23 = scalar_lea.sflag [#allocation4], 1
    %24 = vsyncpa %s23, 0
    loop: start=0, step=1, limit=6
    $region2: #{encoder_block_forward.1} parent=1 // loop_pre_header
      _
    $region3: #{encoder_block_forward.1} parent=1 // loop_header
      %s26 = sphi 0, %s30
      %p27 = scmp.ge.s32.totalorder %s26, 6
      %s33 = sphi 0, %s45
      %s34 = sphi 0, %s41
      %s35 = sphi 0, %s33
      %s36 = sphi 0, %s34
      %s37 = sphi 0, %s35
      %s38 = sphi 0, %s36
      %s48 = sphi 0, %s50
      %s51 = sphi 0, %s48
      %s52 = sphi 0, %s51
      %s68 = sphi 0, %s52
      %s74 = sphi 0, %s76
      %s77 = sphi 0, %s74
      %s78 = sphi 0, %s77
      %s94 = sphi 0, %s78
      %s100 = sphi 0, %s102
      %s103 = sphi 0, %s100
      %s104 = sphi 0, %s103
      %s120 = sphi 0, %s104
      %s126 = sphi 0, %s128
      %s129 = sphi 0, %s126
      %s130 = sphi 0, %s129
      %s146 = sphi 0, %s130
      %s152 = sphi 0, %s154
      %s155 = sphi 0, %s152
      %s156 = sphi 0, %s155
      %s172 = sphi 0, %s156
      %s178 = sphi 0, %s180
      %s181 = sphi 0, %s178
      %s182 = sphi 0, %s181
      %s198 = sphi 0, %s182
      %s204 = sphi 0, %s206
      %s207 = sphi 0, %s204
      %s208 = sphi 0, %s207
      %s224 = sphi 0, %s208
      %s230 = sphi 0, %s232
      %s233 = sphi 0, %s230
      %s234 = sphi 0, %s233
      %s250 = sphi 0, %s234
      %s256 = sphi 0, %s258
      %s259 = sphi 0, %s256
      %s260 = sphi 0, %s259
      %s276 = sphi 0, %s260
      %s282 = sphi 0, %s284
      %s285 = sphi 0, %s282
      %s286 = sphi 0, %s285
      %s302 = sphi 0, %s286
      %s308 = sphi 0, %s310
      %s311 = sphi 0, %s308
      %s312 = sphi 0, %s311
      %s328 = sphi 0, %s312
      %s334 = sphi 0, %s336
      %s337 = sphi 0, %s334
      %s338 = sphi 0, %s337
      %s354 = sphi 0, %s338
      %s360 = sphi 0, %s362
      %s363 = sphi 0, %s360
      %s364 = sphi 0, %s363
      %s380 = sphi 0, %s364
      %s384 = sphi 0, %s384
      %s386 = sphi 0, %s384
      %s387 = sphi 0, %s386
      %s401 = sphi 0, %s387
      %s405 = sphi 0, %s405
      %s407 = sphi 0, %s405
      %s408 = sphi 0, %s407
      %s422 = sphi 0, %s408
      %s428 = sphi 0, %s430
      %s431 = sphi 0, %s428
      %s432 = sphi 0, %s431
      %s448 = sphi 0, %s432
      %s456 = sphi 0, %s458
      %s459 = sphi 0, %s456
      %s460 = sphi 0, %s459
      %s476 = sphi 0, %s460
    $region4: #{encoder_block_forward.1} parent=1 // loop_header_branch
      %29 = sbr.rel (%p27) target = $region8
    $region5: #{encoder_block_forward.1} parent=1 // loop_body
      %s31 = ssub.s32 %s26, 1
      %s32 = ssub.s32 %s26, 2
      %s39 = sadd.s32 1, %s34
      %p40 = scmp.ge.s32.totalorder %s39, 2
      %s41 = scalar_select %p40, 0, %s39
      %s42 = sadd.s32 1, %s33
      %s43 = scalar_select %p40, %s42, %s33
      %p44 = scmp.ge.s32.totalorder %s43, 2
      %s45 = scalar_select %p44, 0, %s43
      %s46 = ssub.s32 %s33, %s45
      %p47 = scmp.eq.s32.totalorder %s46, 0
      %s49 = sadd.s32 %s48, 1
      %s50 = scalar_select %p47, %s48, %s49
      %p53 = pneg %p47
      %p54 = scmp.eq.s32.totalorder %s26, 3
      %p55 = por %p53, %p54
      %p56 = scmp.ne.s32.totalorder %s48, %s51
      %p57 = scmp.eq.s32.totalorder %s26, 0
      %p58 = por %p56, %p57
      %p59 = scmp.ne.s32.totalorder %s48, %s51
      %p60 = scmp.eq.s32.totalorder %s31, 3
      %p61 = por %p59, %p60
      %p62 = scmp.ne.s32.totalorder %s51, %s52
      %p63 = scmp.eq.s32.totalorder %s31, 0
      %p64 = por %p62, %p63
      %p65 = scmp.ne.s32.totalorder %s51, %s52
      %p66 = scmp.eq.s32.totalorder %s32, 3
      %p67 = por %p65, %p66
      %p69 = scmp.ne.s32.totalorder %s52, %s68
      %p70 = scmp.eq.s32.totalorder %s32, 0
      %p71 = por %p69, %p70
      %s72 = ssub.s32 %s34, %s41
      %p73 = scmp.eq.s32.totalorder %s72, 0
      %s75 = sadd.s32 %s74, 1
      %s76 = scalar_select %p73, %s74, %s75
      %p79 = pneg %p73
      %p80 = scmp.eq.s32.totalorder %s26, 3
      %p81 = por %p79, %p80
      %p82 = scmp.ne.s32.totalorder %s74, %s77
      %p83 = scmp.eq.s32.totalorder %s26, 0
      %p84 = por %p82, %p83
      %p85 = scmp.ne.s32.totalorder %s74, %s77
      %p86 = scmp.eq.s32.totalorder %s31, 3
      %p87 = por %p85, %p86
      %p88 = scmp.ne.s32.totalorder %s77, %s78
      %p89 = scmp.eq.s32.totalorder %s31, 0
      %p90 = por %p88, %p89
      %p91 = scmp.ne.s32.totalorder %s77, %s78
      %p92 = scmp.eq.s32.totalorder %s32, 3
      %p93 = por %p91, %p92
      %p95 = scmp.ne.s32.totalorder %s78, %s94
      %p96 = scmp.eq.s32.totalorder %s32, 0
      %p97 = por %p95, %p96
      %s98 = ssub.s32 %s34, %s41
      %p99 = scmp.eq.s32.totalorder %s98, 0
      %s101 = sadd.s32 %s100, 1
      %s102 = scalar_select %p99, %s100, %s101
      %p105 = pneg %p99
      %p106 = scmp.eq.s32.totalorder %s26, 3
      %p107 = por %p105, %p106
      %p108 = scmp.ne.s32.totalorder %s100, %s103
      %p109 = scmp.eq.s32.totalorder %s26, 0
      %p110 = por %p108, %p109
      %p111 = scmp.ne.s32.totalorder %s100, %s103
      %p112 = scmp.eq.s32.totalorder %s31, 3
      %p113 = por %p111, %p112
      %p114 = scmp.ne.s32.totalorder %s103, %s104
      %p115 = scmp.eq.s32.totalorder %s31, 0
      %p116 = por %p114, %p115
      %p117 = scmp.ne.s32.totalorder %s103, %s104
      %p118 = scmp.eq.s32.totalorder %s32, 3
      %p119 = por %p117, %p118
      %p121 = scmp.ne.s32.totalorder %s104, %s120
      %p122 = scmp.eq.s32.totalorder %s32, 0
      %p123 = por %p121, %p122
      %s124 = ssub.s32 %s34, %s41
      %p125 = scmp.eq.s32.totalorder %s124, 0
      %s127 = sadd.s32 %s126, 1
      %s128 = scalar_select %p125, %s126, %s127
      %p131 = pneg %p125
      %p132 = scmp.eq.s32.totalorder %s26, 3
      %p133 = por %p131, %p132
      %p134 = scmp.ne.s32.totalorder %s126, %s129
      %p135 = scmp.eq.s32.totalorder %s26, 0
      %p136 = por %p134, %p135
      %p137 = scmp.ne.s32.totalorder %s126, %s129
      %p138 = scmp.eq.s32.totalorder %s31, 3
      %p139 = por %p137, %p138
      %p140 = scmp.ne.s32.totalorder %s129, %s130
      %p141 = scmp.eq.s32.totalorder %s31, 0
      %p142 = por %p140, %p141
      %p143 = scmp.ne.s32.totalorder %s129, %s130
      %p144 = scmp.eq.s32.totalorder %s32, 3
      %p145 = por %p143, %p144
      %p147 = scmp.ne.s32.totalorder %s130, %s146
      %p148 = scmp.eq.s32.totalorder %s32, 0
      %p149 = por %p147, %p148
      %s150 = ssub.s32 %s34, %s41
      %p151 = scmp.eq.s32.totalorder %s150, 0
      %s153 = sadd.s32 %s152, 1
      %s154 = scalar_select %p151, %s152, %s153
      %p157 = pneg %p151
      %p158 = scmp.eq.s32.totalorder %s26, 3
      %p159 = por %p157, %p158
      %p160 = scmp.ne.s32.totalorder %s152, %s155
      %p161 = scmp.eq.s32.totalorder %s26, 0
      %p162 = por %p160, %p161
      %p163 = scmp.ne.s32.totalorder %s152, %s155
      %p164 = scmp.eq.s32.totalorder %s31, 3
      %p165 = por %p163, %p164
      %p166 = scmp.ne.s32.totalorder %s155, %s156
      %p167 = scmp.eq.s32.totalorder %s31, 0
      %p168 = por %p166, %p167
      %p169 = scmp.ne.s32.totalorder %s155, %s156
      %p170 = scmp.eq.s32.totalorder %s32, 3
      %p171 = por %p169, %p170
      %p173 = scmp.ne.s32.totalorder %s156, %s172
      %p174 = scmp.eq.s32.totalorder %s32, 0
      %p175 = por %p173, %p174
      %s176 = ssub.s32 %s34, %s41
      %p177 = scmp.eq.s32.totalorder %s176, 0
      %s179 = sadd.s32 %s178, 1
      %s180 = scalar_select %p177, %s178, %s179
      %p183 = pneg %p177
      %p184 = scmp.eq.s32.totalorder %s26, 3
      %p185 = por %p183, %p184
      %p186 = scmp.ne.s32.totalorder %s178, %s181
      %p187 = scmp.eq.s32.totalorder %s26, 0
      %p188 = por %p186, %p187
      %p189 = scmp.ne.s32.totalorder %s178, %s181
      %p190 = scmp.eq.s32.totalorder %s31, 3
      %p191 = por %p189, %p190
      %p192 = scmp.ne.s32.totalorder %s181, %s182
      %p193 = scmp.eq.s32.totalorder %s31, 0
      %p194 = por %p192, %p193
      %p195 = scmp.ne.s32.totalorder %s181, %s182
      %p196 = scmp.eq.s32.totalorder %s32, 3
      %p197 = por %p195, %p196
      %p199 = scmp.ne.s32.totalorder %s182, %s198
      %p200 = scmp.eq.s32.totalorder %s32, 0
      %p201 = por %p199, %p200
      %s202 = ssub.s32 %s34, %s41
      %p203 = scmp.eq.s32.totalorder %s202, 0
      %s205 = sadd.s32 %s204, 1
      %s206 = scalar_select %p203, %s204, %s205
      %p209 = pneg %p203
      %p210 = scmp.eq.s32.totalorder %s26, 3
      %p211 = por %p209, %p210
      %p212 = scmp.ne.s32.totalorder %s204, %s207
      %p213 = scmp.eq.s32.totalorder %s26, 0
      %p214 = por %p212, %p213
      %p215 = scmp.ne.s32.totalorder %s204, %s207
      %p216 = scmp.eq.s32.totalorder %s31, 3
      %p217 = por %p215, %p216
      %p218 = scmp.ne.s32.totalorder %s207, %s208
      %p219 = scmp.eq.s32.totalorder %s31, 0
      %p220 = por %p218, %p219
      %p221 = scmp.ne.s32.totalorder %s207, %s208
      %p222 = scmp.eq.s32.totalorder %s32, 3
      %p223 = por %p221, %p222
      %p225 = scmp.ne.s32.totalorder %s208, %s224
      %p226 = scmp.eq.s32.totalorder %s32, 0
      %p227 = por %p225, %p226
      %s228 = ssub.s32 %s34, %s41
      %p229 = scmp.eq.s32.totalorder %s228, 0
      %s231 = sadd.s32 %s230, 1
      %s232 = scalar_select %p229, %s230, %s231
      %p235 = pneg %p229
      %p236 = scmp.eq.s32.totalorder %s26, 3
      %p237 = por %p235, %p236
      %p238 = scmp.ne.s32.totalorder %s230, %s233
      %p239 = scmp.eq.s32.totalorder %s26, 0
      %p240 = por %p238, %p239
      %p241 = scmp.ne.s32.totalorder %s230, %s233
      %p242 = scmp.eq.s32.totalorder %s31, 3
      %p243 = por %p241, %p242
      %p244 = scmp.ne.s32.totalorder %s233, %s234
      %p245 = scmp.eq.s32.totalorder %s31, 0
      %p246 = por %p244, %p245
      %p247 = scmp.ne.s32.totalorder %s233, %s234
      %p248 = scmp.eq.s32.totalorder %s32, 3
      %p249 = por %p247, %p248
      %p251 = scmp.ne.s32.totalorder %s234, %s250
      %p252 = scmp.eq.s32.totalorder %s32, 0
      %p253 = por %p251, %p252
      %s254 = ssub.s32 %s34, %s41
      %p255 = scmp.eq.s32.totalorder %s254, 0
      %s257 = sadd.s32 %s256, 1
      %s258 = scalar_select %p255, %s256, %s257
      %p261 = pneg %p255
      %p262 = scmp.eq.s32.totalorder %s26, 3
      %p263 = por %p261, %p262
      %p264 = scmp.ne.s32.totalorder %s256, %s259
      %p265 = scmp.eq.s32.totalorder %s26, 0
      %p266 = por %p264, %p265
      %p267 = scmp.ne.s32.totalorder %s256, %s259
      %p268 = scmp.eq.s32.totalorder %s31, 3
      %p269 = por %p267, %p268
      %p270 = scmp.ne.s32.totalorder %s259, %s260
      %p271 = scmp.eq.s32.totalorder %s31, 0
      %p272 = por %p270, %p271
      %p273 = scmp.ne.s32.totalorder %s259, %s260
      %p274 = scmp.eq.s32.totalorder %s32, 3
      %p275 = por %p273, %p274
      %p277 = scmp.ne.s32.totalorder %s260, %s276
      %p278 = scmp.eq.s32.totalorder %s32, 0
      %p279 = por %p277, %p278
      %s280 = ssub.s32 %s34, %s41
      %p281 = scmp.eq.s32.totalorder %s280, 0
      %s283 = sadd.s32 %s282, 1
      %s284 = scalar_select %p281, %s282, %s283
      %p287 = pneg %p281
      %p288 = scmp.eq.s32.totalorder %s26, 3
      %p289 = por %p287, %p288
      %p290 = scmp.ne.s32.totalorder %s282, %s285
      %p291 = scmp.eq.s32.totalorder %s26, 0
      %p292 = por %p290, %p291
      %p293 = scmp.ne.s32.totalorder %s282, %s285
      %p294 = scmp.eq.s32.totalorder %s31, 3
      %p295 = por %p293, %p294
      %p296 = scmp.ne.s32.totalorder %s285, %s286
      %p297 = scmp.eq.s32.totalorder %s31, 0
      %p298 = por %p296, %p297
      %p299 = scmp.ne.s32.totalorder %s285, %s286
      %p300 = scmp.eq.s32.totalorder %s32, 3
      %p301 = por %p299, %p300
      %p303 = scmp.ne.s32.totalorder %s286, %s302
      %p304 = scmp.eq.s32.totalorder %s32, 0
      %p305 = por %p303, %p304
      %s306 = ssub.s32 %s34, %s41
      %p307 = scmp.eq.s32.totalorder %s306, 0
      %s309 = sadd.s32 %s308, 1
      %s310 = scalar_select %p307, %s308, %s309
      %p313 = pneg %p307
      %p314 = scmp.eq.s32.totalorder %s26, 3
      %p315 = por %p313, %p314
      %p316 = scmp.ne.s32.totalorder %s308, %s311
      %p317 = scmp.eq.s32.totalorder %s26, 0
      %p318 = por %p316, %p317
      %p319 = scmp.ne.s32.totalorder %s308, %s311
      %p320 = scmp.eq.s32.totalorder %s31, 3
      %p321 = por %p319, %p320
      %p322 = scmp.ne.s32.totalorder %s311, %s312
      %p323 = scmp.eq.s32.totalorder %s31, 0
      %p324 = por %p322, %p323
      %p325 = scmp.ne.s32.totalorder %s311, %s312
      %p326 = scmp.eq.s32.totalorder %s32, 3
      %p327 = por %p325, %p326
      %p329 = scmp.ne.s32.totalorder %s312, %s328
      %p330 = scmp.eq.s32.totalorder %s32, 0
      %p331 = por %p329, %p330
      %s332 = ssub.s32 %s34, %s41
      %p333 = scmp.eq.s32.totalorder %s332, 0
      %s335 = sadd.s32 %s334, 1
      %s336 = scalar_select %p333, %s334, %s335
      %p339 = pneg %p333
      %p340 = scmp.eq.s32.totalorder %s26, 3
      %p341 = por %p339, %p340
      %p342 = scmp.ne.s32.totalorder %s334, %s337
      %p343 = scmp.eq.s32.totalorder %s26, 0
      %p344 = por %p342, %p343
      %p345 = scmp.ne.s32.totalorder %s334, %s337
      %p346 = scmp.eq.s32.totalorder %s31, 3
      %p347 = por %p345, %p346
      %p348 = scmp.ne.s32.totalorder %s337, %s338
      %p349 = scmp.eq.s32.totalorder %s31, 0
      %p350 = por %p348, %p349
      %p351 = scmp.ne.s32.totalorder %s337, %s338
      %p352 = scmp.eq.s32.totalorder %s32, 3
      %p353 = por %p351, %p352
      %p355 = scmp.ne.s32.totalorder %s338, %s354
      %p356 = scmp.eq.s32.totalorder %s32, 0
      %p357 = por %p355, %p356
      %s358 = ssub.s32 %s34, %s41
      %p359 = scmp.eq.s32.totalorder %s358, 0
      %s361 = sadd.s32 %s360, 1
      %s362 = scalar_select %p359, %s360, %s361
      %p365 = pneg %p359
      %p366 = scmp.eq.s32.totalorder %s26, 3
      %p367 = por %p365, %p366
      %p368 = scmp.ne.s32.totalorder %s360, %s363
      %p369 = scmp.eq.s32.totalorder %s26, 0
      %p370 = por %p368, %p369
      %p371 = scmp.ne.s32.totalorder %s360, %s363
      %p372 = scmp.eq.s32.totalorder %s31, 3
      %p373 = por %p371, %p372
      %p374 = scmp.ne.s32.totalorder %s363, %s364
      %p375 = scmp.eq.s32.totalorder %s31, 0
      %p376 = por %p374, %p375
      %p377 = scmp.ne.s32.totalorder %s363, %s364
      %p378 = scmp.eq.s32.totalorder %s32, 3
      %p379 = por %p377, %p378
      %p381 = scmp.ne.s32.totalorder %s364, %s380
      %p382 = scmp.eq.s32.totalorder %s32, 0
      %p383 = por %p381, %p382
      %s385 = sadd.s32 %s384, 1
      %p388 = scmp.eq.s32.totalorder %s26, 3
      %p389 = scmp.ne.s32.totalorder %s384, %s386
      %p390 = scmp.eq.s32.totalorder %s26, 0
      %p391 = por %p389, %p390
      %p392 = scmp.ne.s32.totalorder %s384, %s386
      %p393 = scmp.eq.s32.totalorder %s31, 3
      %p394 = por %p392, %p393
      %p395 = scmp.ne.s32.totalorder %s386, %s387
      %p396 = scmp.eq.s32.totalorder %s31, 0
      %p397 = por %p395, %p396
      %p398 = scmp.ne.s32.totalorder %s386, %s387
      %p399 = scmp.eq.s32.totalorder %s32, 3
      %p400 = por %p398, %p399
      %p402 = scmp.ne.s32.totalorder %s387, %s401
      %p403 = scmp.eq.s32.totalorder %s32, 0
      %p404 = por %p402, %p403
      %s406 = sadd.s32 %s405, 1
      %p409 = scmp.eq.s32.totalorder %s26, 3
      %p410 = scmp.ne.s32.totalorder %s405, %s407
      %p411 = scmp.eq.s32.totalorder %s26, 0
      %p412 = por %p410, %p411
      %p413 = scmp.ne.s32.totalorder %s405, %s407
      %p414 = scmp.eq.s32.totalorder %s31, 3
      %p415 = por %p413, %p414
      %p416 = scmp.ne.s32.totalorder %s407, %s408
      %p417 = scmp.eq.s32.totalorder %s31, 0
      %p418 = por %p416, %p417
      %p419 = scmp.ne.s32.totalorder %s407, %s408
      %p420 = scmp.eq.s32.totalorder %s32, 3
      %p421 = por %p419, %p420
      %p423 = scmp.ne.s32.totalorder %s408, %s422
      %p424 = scmp.eq.s32.totalorder %s32, 0
      %p425 = por %p423, %p424
      %s426 = ssub.s32 %s33, %s45
      %p427 = scmp.eq.s32.totalorder %s426, 0
      %s429 = sadd.s32 %s428, 1
      %s430 = scalar_select %p427, %s428, %s429
      %p433 = pneg %p427
      %p434 = scmp.eq.s32.totalorder %s26, 3
      %p435 = por %p433, %p434
      %p436 = scmp.ne.s32.totalorder %s428, %s431
      %p437 = scmp.eq.s32.totalorder %s26, 0
      %p438 = por %p436, %p437
      %p439 = scmp.ne.s32.totalorder %s428, %s431
      %p440 = scmp.eq.s32.totalorder %s31, 3
      %p441 = por %p439, %p440
      %p442 = scmp.ne.s32.totalorder %s431, %s432
      %p443 = scmp.eq.s32.totalorder %s31, 0
      %p444 = por %p442, %p443
      %p445 = scmp.ne.s32.totalorder %s431, %s432
      %p446 = scmp.eq.s32.totalorder %s32, 3
      %p447 = por %p445, %p446
      %p449 = scmp.ne.s32.totalorder %s432, %s448
      %p450 = scmp.eq.s32.totalorder %s32, 0
      %p451 = por %p449, %p450
      %s452 = ssub.s32 %s34, %s41
      %s453 = ssub.s32 %s33, %s45
      %s454 = sor.u32 %s452, %s453
      %p455 = scmp.eq.s32.totalorder %s454, 0
      %s457 = sadd.s32 %s456, 1
      %s458 = scalar_select %p455, %s456, %s457
      %p461 = pneg %p455
      %p462 = scmp.eq.s32.totalorder %s26, 3
      %p463 = por %p461, %p462
      %p464 = scmp.ne.s32.totalorder %s456, %s459
      %p465 = scmp.eq.s32.totalorder %s26, 0
      %p466 = por %p464, %p465
      %p467 = scmp.ne.s32.totalorder %s456, %s459
      %p468 = scmp.eq.s32.totalorder %s31, 3
      %p469 = por %p467, %p468
      %p470 = scmp.ne.s32.totalorder %s459, %s460
      %p471 = scmp.eq.s32.totalorder %s31, 0
      %p472 = por %p470, %p471
      %p473 = scmp.ne.s32.totalorder %s459, %s460
      %p474 = scmp.eq.s32.totalorder %s32, 3
      %p475 = por %p473, %p474
      %p477 = scmp.ne.s32.totalorder %s460, %s476
      %p478 = scmp.eq.s32.totalorder %s32, 0
      %p479 = por %p477, %p478
      %p480 = scmp.le.s32.totalorder 1, %s26
      %p481 = scmp.lt.s32.totalorder %s26, 5
      %p482 = pnand %p480, %p481
      %p483 = pneg %p482
      // Predicated region
      $region9: #{encoder_block_forward.1} parent=5 // pred_check
        _
      $region10: #{encoder_block_forward.1} parent=5 // pred_check_branch
        %485 = sbr.rel (%p482) target = $region12
      $region11: #{encoder_block_forward.1} parent=5 // pred_region
        %s486 = ssub.s32 %s26, 1
        // Predicated region
        $region13: #{encoder_block_forward.1} parent=11 // pred_check
          %p487 = pneg %p397
        $region14: #{encoder_block_forward.1} parent=11 // pred_check_branch
          %489 = sbr.rel (%p487) target = $region16
        $region15: #{encoder_block_forward.1} parent=11 // pred_region
          _
        $region16: #{encoder_block_forward.1} parent=11 // pred_fallthru
          _
        // Predicated region
        $region17: #{encoder_block_forward.1} parent=11 // pred_check
          %p490 = pneg %p418
        $region18: #{encoder_block_forward.1} parent=11 // pred_check_branch
          %492 = sbr.rel (%p490) target = $region20
        $region19: #{encoder_block_forward.1} parent=11 // pred_region
          _
        $region20: #{encoder_block_forward.1} parent=11 // pred_fallthru
          _
      $region12: #{encoder_block_forward.1} parent=5 // pred_fallthru
        _
      %p493 = scmp.lt.s32.totalorder %s26, 4
      // Predicated region
      $region21: #{encoder_block_forward.1} parent=5 // pred_check
        %p494 = pneg %p493
      $region22: #{encoder_block_forward.1} parent=5 // pred_check_branch
        %496 = sbr.rel (%p494) target = $region24
      $region23: #{encoder_block_forward.1} parent=5 // pred_region
        // Predicated region
        $region25: #{encoder_block_forward.1} parent=23 // pred_check
          %p497 = pneg %p58
        $region26: #{encoder_block_forward.1} parent=23 // pred_check_branch
          %499 = sbr.rel (%p497) target = $region28
        $region27: #{encoder_block_forward.1} parent=23 // pred_region
          %p500 = scmp.lt.s32.totalorder %s33, 1
          %s501 = scalar_select %p500, %s33, 1
          %s502 = smul.addr %s501, 8
          %s503 = scalar_lea.vmem %s0, %s502
        $region28: #{encoder_block_forward.1} parent=23 // pred_fallthru
          _
        // Predicated region
        $region29: #{encoder_block_forward.1} parent=23 // pred_check
          %p504 = pneg %p84
        $region30: #{encoder_block_forward.1} parent=23 // pred_check_branch
          %506 = sbr.rel (%p504) target = $region32
        $region31: #{encoder_block_forward.1} parent=23 // pred_region
          %p507 = scmp.lt.s32.totalorder %s34, 1
          %s508 = scalar_select %p507, %s34, 1
          %s509 = smul.addr %s508, 12
          %s510 = smul.addr %s509, 4
          %s511 = scalar_lea.vmem %s1, %s510
        $region32: #{encoder_block_forward.1} parent=23 // pred_fallthru
          _
        // Predicated region
        $region33: #{encoder_block_forward.1} parent=23 // pred_check
          %p512 = pneg %p110
        $region34: #{encoder_block_forward.1} parent=23 // pred_check_branch
          %514 = sbr.rel (%p512) target = $region36
        $region35: #{encoder_block_forward.1} parent=23 // pred_region
          %p515 = scmp.lt.s32.totalorder %s34, 1
          %s516 = scalar_select %p515, %s34, 1
          %s517 = smul.addr %s516, 12
          %s518 = smul.addr %s517, 8
          %s519 = scalar_lea.vmem %s2, %s518
        $region36: #{encoder_block_forward.1} parent=23 // pred_fallthru
          _
        // Predicated region
        $region37: #{encoder_block_forward.1} parent=23 // pred_check
          %p520 = pneg %p136
        $region38: #{encoder_block_forward.1} parent=23 // pred_check_branch
          %522 = sbr.rel (%p520) target = $region40
        $region39: #{encoder_block_forward.1} parent=23 // pred_region
          %p523 = scmp.lt.s32.totalorder %s34, 1
          %s524 = scalar_select %p523, %s34, 1
          %s525 = smul.addr %s524, 4
          %s526 = smul.addr %s525, 4
          %s527 = scalar_lea.vmem %s3, %s526
        $region40: #{encoder_block_forward.1} parent=23 // pred_fallthru
          _
        // Predicated region
        $region41: #{encoder_block_forward.1} parent=23 // pred_check
          %p528 = pneg %p162
        $region42: #{encoder_block_forward.1} parent=23 // pred_check_branch
          %530 = sbr.rel (%p528) target = $region44
        $region43: #{encoder_block_forward.1} parent=23 // pred_region
          %p531 = scmp.lt.s32.totalorder %s34, 1
          %s532 = scalar_select %p531, %s34, 1
          %s533 = scalar_lea.vmem %s4, %s532
        $region44: #{encoder_block_forward.1} parent=23 // pred_fallthru
          _
        // Predicated region
        $region45: #{encoder_block_forward.1} parent=23 // pred_check
          %p534 = pneg %p188
        $region46: #{encoder_block_forward.1} parent=23 // pred_check_branch
          %536 = sbr.rel (%p534) target = $region48
        $region47: #{encoder_block_forward.1} parent=23 // pred_region
          %p537 = scmp.lt.s32.totalorder %s34, 1
          %s538 = scalar_select %p537, %s34, 1
          %s539 = scalar_lea.vmem %s5, %s538
        $region48: #{encoder_block_forward.1} parent=23 // pred_fallthru
          _
        // Predicated region
        $region49: #{encoder_block_forward.1} parent=23 // pred_check
          %p540 = pneg %p214
        $region50: #{encoder_block_forward.1} parent=23 // pred_check_branch
          %542 = sbr.rel (%p540) target = $region52
        $region51: #{encoder_block_forward.1} parent=23 // pred_region
          %p543 = scmp.lt.s32.totalorder %s34, 1
          %s544 = scalar_select %p543, %s34, 1
          %s545 = scalar_lea.vmem %s6, %s544
        $region52: #{encoder_block_forward.1} parent=23 // pred_fallthru
          _
        // Predicated region
        $region53: #{encoder_block_forward.1} parent=23 // pred_check
          %p546 = pneg %p240
        $region54: #{encoder_block_forward.1} parent=23 // pred_check_branch
          %548 = sbr.rel (%p546) target = $region56
        $region55: #{encoder_block_forward.1} parent=23 // pred_region
          %p549 = scmp.lt.s32.totalorder %s34, 1
          %s550 = scalar_select %p549, %s34, 1
          %s551 = smul.addr %s550, 4
          %s552 = smul.addr %s551, 4
          %s553 = scalar_lea.vmem %s7, %s552
        $region56: #{encoder_block_forward.1} parent=23 // pred_fallthru
          _
        // Predicated region
        $region57: #{encoder_block_forward.1} parent=23 // pred_check
          %p554 = pneg %p266
        $region58: #{encoder_block_forward.1} parent=23 // pred_check_branch
          %556 = sbr.rel (%p554) target = $region60
        $region59: #{encoder_block_forward.1} parent=23 // pred_region
          %p557 = scmp.lt.s32.totalorder %s34, 1
          %s558 = scalar_select %p557, %s34, 1
          %s559 = scalar_lea.vmem %s8, %s558
        $region60: #{encoder_block_forward.1} parent=23 // pred_fallthru
          _
        // Predicated region
        $region61: #{encoder_block_forward.1} parent=23 // pred_check
          %p560 = pneg %p292
        $region62: #{encoder_block_forward.1} parent=23 // pred_check_branch
          %562 = sbr.rel (%p560) target = $region64
        $region63: #{encoder_block_forward.1} parent=23 // pred_region
          %p563 = scmp.lt.s32.totalorder %s34, 1
          %s564 = scalar_select %p563, %s34, 1
          %s565 = smul.addr %s564, 8
          %s566 = smul.addr %s565, 4
          %s567 = scalar_lea.vmem %s9, %s566
        $region64: #{encoder_block_forward.1} parent=23 // pred_fallthru
          _
        // Predicated region
        $region65: #{encoder_block_forward.1} parent=23 // pred_check
          %p568 = pneg %p318
        $region66: #{encoder_block_forward.1} parent=23 // pred_check_branch
          %570 = sbr.rel (%p568) target = $region68
        $region67: #{encoder_block_forward.1} parent=23 // pred_region
          %p571 = scmp.lt.s32.totalorder %s34, 1
          %s572 = scalar_select %p571, %s34, 1
          %s573 = scalar_lea.vmem %s10, %s572
        $region68: #{encoder_block_forward.1} parent=23 // pred_fallthru
          _
        // Predicated region
        $region69: #{encoder_block_forward.1} parent=23 // pred_check
          %p574 = pneg %p344
        $region70: #{encoder_block_forward.1} parent=23 // pred_check_branch
          %576 = sbr.rel (%p574) target = $region72
        $region71: #{encoder_block_forward.1} parent=23 // pred_region
          %p577 = scmp.lt.s32.totalorder %s34, 1
          %s578 = scalar_select %p577, %s34, 1
          %s579 = scalar_lea.vmem %s11, %s578
        $region72: #{encoder_block_forward.1} parent=23 // pred_fallthru
          _
        // Predicated region
        $region73: #{encoder_block_forward.1} parent=23 // pred_check
          %p580 = pneg %p370
        $region74: #{encoder_block_forward.1} parent=23 // pred_check_branch
          %582 = sbr.rel (%p580) target = $region76
        $region75: #{encoder_block_forward.1} parent=23 // pred_region
          %p583 = scmp.lt.s32.totalorder %s34, 1
          %s584 = scalar_select %p583, %s34, 1
          %s585 = scalar_lea.vmem %s12, %s584
        $region76: #{encoder_block_forward.1} parent=23 // pred_fallthru
          _
      $region24: #{encoder_block_forward.1} parent=5 // pred_fallthru
        _
      %p586 = scmp.le.s32.totalorder 1, %s26
      %p587 = scmp.lt.s32.totalorder %s26, 5
      %p588 = pnand %p586, %p587
      %p589 = pneg %p588
      // Predicated region
      $region77: #{encoder_block_forward.1} parent=5 // pred_check
        _
      $region78: #{encoder_block_forward.1} parent=5 // pred_check_branch
        %591 = sbr.rel (%p588) target = $region80
      $region79: #{encoder_block_forward.1} parent=5 // pred_region
        %s592 = ssub.s32 %s26, 1
        %p593 = scmp.lt.s32.totalorder %s35, 1
        %s594 = scalar_select %p593, %s35, 1
        %s595 = smul.addr %s594, 8
        %s596 = scalar_lea.vmem %s0, %s595
        %p597 = pneg %p64
        %p598 = pneg %p61
        %p599 = scmp.lt.s32.totalorder %s36, 1
        %s600 = scalar_select %p599, %s36, 1
        %s601 = smul.addr %s600, 12
        %s602 = smul.addr %s601, 4
        %s603 = scalar_lea.vmem %s1, %s602
        %p604 = pneg %p90
        %p605 = pneg %p87
        %p606 = scmp.lt.s32.totalorder %s36, 1
        %s607 = scalar_select %p606, %s36, 1
        %s608 = smul.addr %s607, 12
        %s609 = smul.addr %s608, 8
        %s610 = scalar_lea.vmem %s2, %s609
        %p611 = pneg %p116
        %p612 = pneg %p113
        %p613 = scmp.lt.s32.totalorder %s36, 1
        %s614 = scalar_select %p613, %s36, 1
        %s615 = smul.addr %s614, 4
        %s616 = smul.addr %s615, 4
        %s617 = scalar_lea.vmem %s3, %s616
        %p618 = pneg %p142
        %p619 = pneg %p139
        %p620 = scmp.lt.s32.totalorder %s36, 1
        %s621 = scalar_select %p620, %s36, 1
        %s622 = scalar_lea.vmem %s4, %s621
        %p623 = pneg %p168
        %p624 = pneg %p165
        %p625 = scmp.lt.s32.totalorder %s36, 1
        %s626 = scalar_select %p625, %s36, 1
        %s627 = scalar_lea.vmem %s5, %s626
        %p628 = pneg %p194
        %p629 = pneg %p191
        %p630 = scmp.lt.s32.totalorder %s36, 1
        %s631 = scalar_select %p630, %s36, 1
        %s632 = scalar_lea.vmem %s6, %s631
        %p633 = pneg %p220
        %p634 = pneg %p217
        %p635 = scmp.lt.s32.totalorder %s36, 1
        %s636 = scalar_select %p635, %s36, 1
        %s637 = smul.addr %s636, 4
        %s638 = smul.addr %s637, 4
        %s639 = scalar_lea.vmem %s7, %s638
        %p640 = pneg %p246
        %p641 = pneg %p243
        %p642 = scmp.lt.s32.totalorder %s36, 1
        %s643 = scalar_select %p642, %s36, 1
        %s644 = scalar_lea.vmem %s8, %s643
        %p645 = pneg %p272
        %p646 = pneg %p269
        %p647 = scmp.lt.s32.totalorder %s36, 1
        %s648 = scalar_select %p647, %s36, 1
        %s649 = smul.addr %s648, 8
        %s650 = smul.addr %s649, 4
        %s651 = scalar_lea.vmem %s9, %s650
        %p652 = pneg %p298
        %p653 = pneg %p295
        %p654 = scmp.lt.s32.totalorder %s36, 1
        %s655 = scalar_select %p654, %s36, 1
        %s656 = scalar_lea.vmem %s10, %s655
        %p657 = pneg %p324
        %p658 = pneg %p321
        %p659 = scmp.lt.s32.totalorder %s36, 1
        %s660 = scalar_select %p659, %s36, 1
        %s661 = scalar_lea.vmem %s11, %s660
        %p662 = pneg %p350
        %p663 = pneg %p347
        %p664 = scmp.lt.s32.totalorder %s36, 1
        %s665 = scalar_select %p664, %s36, 1
        %s666 = scalar_lea.vmem %s12, %s665
        %p667 = pneg %p376
        %p668 = pneg %p373
        %p669 = pneg %p397
        %p670 = pneg %p394
        %p671 = pneg %p418
        %p672 = pneg %p415
        %p673 = pneg %p444
        %p674 = pneg %p441
        %s675 = sand.u32 %s431, 1
        %s676 = scalar_lea.sflag [#allocation4], %s675
        %s677 = sand.u32 %s431, 1
        %s678 = smul.addr %s677, 8
        %s679 = scalar_lea.vmem [#allocation3], %s678
        %p680 = pneg %p472
        %p681 = pneg %p469
        %p682 = scmp.lt.s32.totalorder %s36, 1
        %s683 = scalar_select %p682, %s36, 1
        %p684 = scmp.lt.s32.totalorder %s35, 1
        %s685 = scalar_select %p684, %s35, 1
        %s686 = smul.addr %s683, 2
        %s687 = sadd.s32 %s685, %s686
        %s688 = smul.addr %s687, 8
        %s689 = scalar_lea.vmem %s16, %s688
        %p690 = scmp.lt.s32.totalorder %s35, 1
        %s691 = scalar_select %p690, %s35, 1
        %s692 = smul.addr %s691, 8
        %s693 = scalar_lea.vmem %s0, %s692
        %p694 = scmp.lt.s32.totalorder %s36, 1
        %s695 = scalar_select %p694, %s36, 1
        %s696 = smul.addr %s695, 12
        %s697 = smul.addr %s696, 4
        %s698 = scalar_lea.vmem %s1, %s697
        %p699 = scmp.lt.s32.totalorder %s36, 1
        %s700 = scalar_select %p699, %s36, 1
        %s701 = smul.addr %s700, 12
        %s702 = smul.addr %s701, 8
        %s703 = scalar_lea.vmem %s2, %s702
        %p704 = scmp.lt.s32.totalorder %s36, 1
        %s705 = scalar_select %p704, %s36, 1
        %s706 = smul.addr %s705, 4
        %s707 = smul.addr %s706, 4
        %s708 = scalar_lea.vmem %s3, %s707
        %p709 = scmp.lt.s32.totalorder %s36, 1
        %s710 = scalar_select %p709, %s36, 1
        %s711 = scalar_lea.vmem %s4, %s710
        %p712 = scmp.lt.s32.totalorder %s36, 1
        %s713 = scalar_select %p712, %s36, 1
        %s714 = scalar_lea.vmem %s5, %s713
        %p715 = scmp.lt.s32.totalorder %s36, 1
        %s716 = scalar_select %p715, %s36, 1
        %s717 = scalar_lea.vmem %s6, %s716
        %p718 = scmp.lt.s32.totalorder %s36, 1
        %s719 = scalar_select %p718, %s36, 1
        %s720 = smul.addr %s719, 4
        %s721 = smul.addr %s720, 4
        %s722 = scalar_lea.vmem %s7, %s721
        %p723 = scmp.lt.s32.totalorder %s36, 1
        %s724 = scalar_select %p723, %s36, 1
        %s725 = scalar_lea.vmem %s8, %s724
        %p726 = scmp.lt.s32.totalorder %s36, 1
        %s727 = scalar_select %p726, %s36, 1
        %s728 = smul.addr %s727, 8
        %s729 = smul.addr %s728, 4
        %s730 = scalar_lea.vmem %s9, %s729
        %p731 = scmp.lt.s32.totalorder %s36, 1
        %s732 = scalar_select %p731, %s36, 1
        %s733 = scalar_lea.vmem %s10, %s732
        %p734 = scmp.lt.s32.totalorder %s36, 1
        %s735 = scalar_select %p734, %s36, 1
        %s736 = scalar_lea.vmem %s11, %s735
        %p737 = scmp.lt.s32.totalorder %s36, 1
        %s738 = scalar_select %p737, %s36, 1
        %s739 = scalar_lea.vmem %s12, %s738
        %p740 = scmp.lt.s32.totalorder %s36, 1
        %s741 = scalar_select %p740, %s36, 1
        %p742 = scmp.lt.s32.totalorder %s35, 1
        %s743 = scalar_select %p742, %s35, 1
        %s744 = smul.addr %s741, 2
        %s745 = sadd.s32 %s743, %s744
        %s746 = smul.addr %s745, 8
        %s747 = scalar_lea.vmem %s16, %s746
        %p749 = scmp.eq.s32.totalorder %s36, 0
        // Predicated region
        $region81: #{encoder_block_forward.1} parent=79 // pred_check
          %p750 = pneg %p749
        $region82: #{encoder_block_forward.1} parent=79 // pred_check_branch
          %752 = sbr.rel (%p750) target = $region84
        $region83: #{encoder_block_forward.1} parent=79 // pred_region
          %v753 = vld [vmem:[%s693] sm:$0xff]
          %vm754 = vcmask 261120
          %755 = vst.msk [vmem:[#allocation2] sm:$0xff] %vm754, %v753
        $region84: #{encoder_block_forward.1} parent=79 // pred_fallthru
          _
        %v756 = vld [vmem:[#allocation2] sm:$0xff]
        %757 = vxpose.xlu0.b32.start [1/16] %v756, 128
        %758 = vxpose.xlu0.b32.cont [2/16] 0.0, 128
        %759 = vxpose.xlu0.b32.cont [3/16] 0.0, 128
        %760 = vxpose.xlu0.b32.cont [4/16] 0.0, 128
        %761 = vxpose.xlu0.b32.cont [5/16] 0.0, 128
        %762 = vxpose.xlu0.b32.cont [6/16] 0.0, 128
        %763 = vxpose.xlu0.b32.cont [7/16] 0.0, 128
        %764 = vxpose.xlu0.b32.cont [8/16] 0.0, 128
        %765 = vxpose.xlu0.b32.cont [9/16] 0.0, 128
        %766 = vxpose.xlu0.b32.cont [10/16] 0.0, 128
        %767 = vxpose.xlu0.b32.cont [11/16] 0.0, 128
        %768 = vxpose.xlu0.b32.cont [12/16] 0.0, 128
        %769 = vxpose.xlu0.b32.cont [13/16] 0.0, 128
        %770 = vxpose.xlu0.b32.cont [14/16] 0.0, 128
        %771 = vxpose.xlu0.b32.cont [15/16] 0.0, 128
        %772 = vxpose.xlu0.b32.end [16/16] 0.0, 128
        %v773 = vpop.trf.xlu0
        %v774 = vpop.trf.xlu0
        %v775 = vpop.trf.xlu0
        %v776 = vpop.trf.xlu0
        %v777 = vpop.trf.xlu0
        %v778 = vpop.trf.xlu0
        %v779 = vpop.trf.xlu0
        %v780 = vpop.trf.xlu0
        %v781 = vpop.trf.xlu0
        %v782 = vpop.trf.xlu0
        %v783 = vpop.trf.xlu0
        %v784 = vpop.trf.xlu0
        %v785 = vpop.trf.xlu0
        %v786 = vpop.trf.xlu0
        %v787 = vpop.trf.xlu0
        %v788 = vpop.trf.xlu0
        %v789 = vpack.c.bf16 %v774, %v773
        %v790 = vpack.c.bf16 %v776, %v775
        %v791 = vld [vmem:[%s698] sm:$0xf]
        %v792 = vld [vmem:[%s698 + $0x4] sm:$0xf]
        %v793 = vld [vmem:[%s698 + $0x8] sm:$0xf]
        %v794 = vld [vmem:[%s698 + $0xc] sm:$0xf]
        %v795 = vld [vmem:[%s698 + $0x10] sm:$0xf]
        %v796 = vld [vmem:[%s698 + $0x14] sm:$0xf]
        %v797 = vld [vmem:[%s698 + $0x18] sm:$0xf]
        %v798 = vld [vmem:[%s698 + $0x1c] sm:$0xf]
        %v799 = vld [vmem:[%s698 + $0x20] sm:$0xf]
        %v800 = vld [vmem:[%s698 + $0x24] sm:$0xf]
        %v801 = vld [vmem:[%s698 + $0x28] sm:$0xf]
        %v802 = vld [vmem:[%s698 + $0x2c] sm:$0xf]
        %v803 = vld [vmem:[%s703] sm:$0xff]
        %v804 = vld [vmem:[%s703 + $0x8] sm:$0xff]
        %v805 = vld [vmem:[%s703 + $0x10] sm:$0xff]
        %v806 = vld [vmem:[%s703 + $0x18] sm:$0xff]
        %v807 = vld [vmem:[%s703 + $0x20] sm:$0xff]
        %v808 = vld [vmem:[%s703 + $0x28] sm:$0xff]
        %v809 = vld [vmem:[%s703 + $0x30] sm:$0xff]
        %v810 = vld [vmem:[%s703 + $0x38] sm:$0xff]
        %v811 = vld [vmem:[%s703 + $0x40] sm:$0xff]
        %v812 = vld [vmem:[%s703 + $0x48] sm:$0xff]
        %v813 = vld [vmem:[%s703 + $0x50] sm:$0xff]
        %v814 = vld [vmem:[%s703 + $0x58] sm:$0xff]
        %816 = vset.pattern.permute.xlu0 0
        %817 = vperm.xlu0 %816, %v803
        %v818 = vpop.permute.xlu0 %817
        %821 = vset.pattern.permute.xlu0 0
        %822 = vperm.xlu0 %821, %v804
        %v823 = vpop.permute.xlu0 %822
        %826 = vset.pattern.permute.xlu0 0
        %827 = vperm.xlu0 %826, %v805
        %v828 = vpop.permute.xlu0 %827
        %831 = vset.pattern.permute.xlu0 0
        %832 = vperm.xlu0 %831, %v806
        %v833 = vpop.permute.xlu0 %832
        %836 = vset.pattern.permute.xlu0 0
        %837 = vperm.xlu0 %836, %v807
        %v838 = vpop.permute.xlu0 %837
        %841 = vset.pattern.permute.xlu0 0
        %842 = vperm.xlu0 %841, %v808
        %v843 = vpop.permute.xlu0 %842
        %846 = vset.pattern.permute.xlu0 0
        %847 = vperm.xlu0 %846, %v809
        %v848 = vpop.permute.xlu0 %847
        %851 = vset.pattern.permute.xlu0 0
        %852 = vperm.xlu0 %851, %v810
        %v853 = vpop.permute.xlu0 %852
        %856 = vset.pattern.permute.xlu0 0
        %857 = vperm.xlu0 %856, %v811
        %v858 = vpop.permute.xlu0 %857
        %861 = vset.pattern.permute.xlu0 0
        %862 = vperm.xlu0 %861, %v812
        %v863 = vpop.permute.xlu0 %862
        %866 = vset.pattern.permute.xlu0 0
        %867 = vperm.xlu0 %866, %v813
        %v868 = vpop.permute.xlu0 %867
        %871 = vset.pattern.permute.xlu0 0
        %872 = vperm.xlu0 %871, %v814
        %v873 = vpop.permute.xlu0 %872
        %v887 = vunpack.c.l.b16 %v791
        %v888 = vunpack.c.l.b16 %v792
        %v889 = vunpack.c.l.b16 %v793
        %v890 = vunpack.c.l.b16 %v794
        %v891 = vunpack.c.l.b16 %v795
        %v892 = vunpack.c.l.b16 %v796
        %v893 = vunpack.c.l.b16 %v797
        %v894 = vunpack.c.l.b16 %v798
        %v895 = vunpack.c.l.b16 %v799
        %v896 = vunpack.c.l.b16 %v800
        %v897 = vunpack.c.l.b16 %v801
        %v898 = vunpack.c.l.b16 %v802
        %v899 = vpack.c.b16 %v888, %v887
        %v900 = vpack.c.b16 %v890, %v889
        %v901 = vpack.c.b16 %v892, %v891
        %v902 = vpack.c.b16 %v894, %v893
        %v903 = vpack.c.b16 %v896, %v895
        %v904 = vpack.c.b16 %v898, %v897
        %vm905 = vcmask 261120
        %v907 = vsel %vm905, %v899, 0
        %v910 = vsel %vm905, %v900, 0
        %v913 = vsel %vm905, %v901, 0
        %v916 = vsel %vm905, %v902, 0
        %v919 = vsel %vm905, %v903, 0
        %v922 = vsel %vm905, %v904, 0
        %924 = vmatpush.bf16.msra.mxu0 0
        %925 = vmatpush.bf16.msra.mxu0 0
        %926 = vmatpush.bf16.msra.mxu0 0
        %927 = vmatpush.bf16.msra.mxu0 0
        %928 = vmatpush.bf16.msra.mxu0 0
        %929 = vmatpush.bf16.msra.mxu0 0
        %930 = vmatpush.bf16.msra.mxu0 %v790
        %931 = vmatpush.bf16.msra.mxu0 %v789
        %932 = vmatmul.bf16.gmra.mxu0 %v907
        %v933 = vpop.f32.mrf.mxu0
        %v934 = vadd.f32 %v818, %v933
        %v935 = vpop.f32.mrf.mxu0
        %v936 = vadd.f32 %v823, %v935
        %937 = vmatmul.bf16.gmra.mxu0 %v910
        %v938 = vpop.f32.mrf.mxu0
        %v939 = vadd.f32 %v828, %v938
        %v940 = vpop.f32.mrf.mxu0
        %v941 = vadd.f32 %v833, %v940
        %942 = vmatmul.bf16.gmra.mxu0 %v913
        %v943 = vpop.f32.mrf.mxu0
        %v944 = vadd.f32 %v838, %v943
        %v945 = vpop.f32.mrf.mxu0
        %v946 = vadd.f32 %v843, %v945
        %947 = vmatmul.bf16.gmra.mxu0 %v916
        %v948 = vpop.f32.mrf.mxu0
        %v949 = vadd.f32 %v848, %v948
        %v950 = vpop.f32.mrf.mxu0
        %v951 = vadd.f32 %v853, %v950
        %952 = vmatmul.bf16.gmra.mxu0 %v919
        %v953 = vpop.f32.mrf.mxu0
        %v954 = vadd.f32 %v858, %v953
        %v955 = vpop.f32.mrf.mxu0
        %v956 = vadd.f32 %v863, %v955
        %957 = vmatmul.bf16.gmra.mxu0 %v922
        %v958 = vpop.f32.mrf.mxu0
        %v959 = vadd.f32 %v868, %v958
        %v960 = vpop.f32.mrf.mxu0
        %v961 = vadd.f32 %v873, %v960
        %962 = vdwg.mxu0
        %v963 = vpack.c.bf16 %v934, %v934
        %v964 = vpack.c.bf16 %v936, %v936
        %v965 = vpack.c.bf16 %v939, %v939
        %v966 = vpack.c.bf16 %v941, %v941
        %v967 = vpack.c.bf16 %v944, %v944
        %v968 = vpack.c.bf16 %v946, %v946
        %v969 = vpack.c.bf16 %v949, %v949
        %v970 = vpack.c.bf16 %v951, %v951
        %v971 = vpack.c.bf16 %v954, %v954
        %v972 = vpack.c.bf16 %v956, %v956
        %v973 = vpack.c.bf16 %v959, %v959
        %v974 = vpack.c.bf16 %v961, %v961
        %975 = vxpose.xlu0.c.b16.start [1/8] %v963, 128
        %976 = vxpose.xlu0.c.b16.cont [2/8] 0, 128
        %977 = vxpose.xlu0.c.b16.cont [3/8] 0, 128
        %978 = vxpose.xlu0.c.b16.cont [4/8] 0, 128
        %979 = vxpose.xlu0.c.b16.cont [5/8] 0, 128
        %980 = vxpose.xlu0.c.b16.cont [6/8] 0, 128
        %981 = vxpose.xlu0.c.b16.cont [7/8] 0, 128
        %982 = vxpose.xlu0.c.b16.end [8/8] 0, 128
        %v983 = vpop.trf.xlu0
        %v984 = vpop.trf.xlu0
        %v985 = vpop.trf.xlu0
        %v986 = vpop.trf.xlu0
        %v987 = vpop.trf.xlu0
        %v988 = vpop.trf.xlu0
        %v989 = vpop.trf.xlu0
        %v990 = vpop.trf.xlu0
        %vm991 = vcmask 64512
        %v993 = vsel %vm991, %v983, 0
        %vm995 = vcmask 1043456
        %v997 = vsel %vm995, %v967, 0
        %999 = vmatpush.bf16.msra.mxu0 0
        %1000 = vmatpush.bf16.msra.mxu0 0
        %1001 = vmatpush.bf16.msra.mxu0 0
        %1002 = vmatpush.bf16.msra.mxu0 0
        %1003 = vmatpush.bf16.msra.mxu0 0
        %1004 = vmatpush.bf16.msra.mxu0 0
        %1005 = vmatpush.bf16.msra.mxu0 0
        %1006 = vmatpush.bf16.msra.mxu0 %v997
        %1007 = vmatmul.bf16.gmra.mxu0 %v993
        %v1008 = vpop.f32.mrf.mxu0
        %v1009 = vadd.f32 0.0, %v1008
        %v1010 = vpop.f32.mrf.mxu0
        %1011 = vdwg.mxu0
        %1012 = vxpose.xlu0.c.b16.start [1/8] %v964, 128
        %1013 = vxpose.xlu0.c.b16.cont [2/8] 0, 128
        %1014 = vxpose.xlu0.c.b16.cont [3/8] 0, 128
        %1015 = vxpose.xlu0.c.b16.cont [4/8] 0, 128
        %1016 = vxpose.xlu0.c.b16.cont [5/8] 0, 128
        %1017 = vxpose.xlu0.c.b16.cont [6/8] 0, 128
        %1018 = vxpose.xlu0.c.b16.cont [7/8] 0, 128
        %1019 = vxpose.xlu0.c.b16.end [8/8] 0, 128
        %v1020 = vpop.trf.xlu0
        %v1021 = vpop.trf.xlu0
        %v1022 = vpop.trf.xlu0
        %v1023 = vpop.trf.xlu0
        %v1024 = vpop.trf.xlu0
        %v1025 = vpop.trf.xlu0
        %v1026 = vpop.trf.xlu0
        %v1027 = vpop.trf.xlu0
        %v1029 = vsel %vm991, %v1020, 0
        %v1032 = vsel %vm995, %v968, 0
        %1034 = vmatpush.bf16.msra.mxu0 0
        %1035 = vmatpush.bf16.msra.mxu0 0
        %1036 = vmatpush.bf16.msra.mxu0 0
        %1037 = vmatpush.bf16.msra.mxu0 0
        %1038 = vmatpush.bf16.msra.mxu0 0
        %1039 = vmatpush.bf16.msra.mxu0 0
        %1040 = vmatpush.bf16.msra.mxu0 0
        %1041 = vmatpush.bf16.msra.mxu0 %v1032
        %1042 = vmatmul.bf16.gmra.mxu0 %v1029
        %v1043 = vpop.f32.mrf.mxu0
        %v1044 = vadd.f32 0.0, %v1043
        %v1045 = vpop.f32.mrf.mxu0
        %1046 = vdwg.mxu0
        %1047 = vxpose.xlu0.c.b16.start [1/8] %v965, 128
        %1048 = vxpose.xlu0.c.b16.cont [2/8] 0, 128
        %1049 = vxpose.xlu0.c.b16.cont [3/8] 0, 128
        %1050 = vxpose.xlu0.c.b16.cont [4/8] 0, 128
        %1051 = vxpose.xlu0.c.b16.cont [5/8] 0, 128
        %1052 = vxpose.xlu0.c.b16.cont [6/8] 0, 128
        %1053 = vxpose.xlu0.c.b16.cont [7/8] 0, 128
        %1054 = vxpose.xlu0.c.b16.end [8/8] 0, 128
        %v1055 = vpop.trf.xlu0
        %v1056 = vpop.trf.xlu0
        %v1057 = vpop.trf.xlu0
        %v1058 = vpop.trf.xlu0
        %v1059 = vpop.trf.xlu0
        %v1060 = vpop.trf.xlu0
        %v1061 = vpop.trf.xlu0
        %v1062 = vpop.trf.xlu0
        %v1064 = vsel %vm991, %v1055, 0
        %v1067 = vsel %vm995, %v969, 0
        %1069 = vmatpush.bf16.msra.mxu0 0
        %1070 = vmatpush.bf16.msra.mxu0 0
        %1071 = vmatpush.bf16.msra.mxu0 0
        %1072 = vmatpush.bf16.msra.mxu0 0
        %1073 = vmatpush.bf16.msra.mxu0 0
        %1074 = vmatpush.bf16.msra.mxu0 0
        %1075 = vmatpush.bf16.msra.mxu0 0
        %1076 = vmatpush.bf16.msra.mxu0 %v1067
        %1077 = vmatmul.bf16.gmra.mxu0 %v1064
        %v1078 = vpop.f32.mrf.mxu0
        %v1079 = vadd.f32 0.0, %v1078
        %v1080 = vpop.f32.mrf.mxu0
        %1081 = vdwg.mxu0
        %1082 = vxpose.xlu0.c.b16.start [1/8] %v966, 128
        %1083 = vxpose.xlu0.c.b16.cont [2/8] 0, 128
        %1084 = vxpose.xlu0.c.b16.cont [3/8] 0, 128
        %1085 = vxpose.xlu0.c.b16.cont [4/8] 0, 128
        %1086 = vxpose.xlu0.c.b16.cont [5/8] 0, 128
        %1087 = vxpose.xlu0.c.b16.cont [6/8] 0, 128
        %1088 = vxpose.xlu0.c.b16.cont [7/8] 0, 128
        %1089 = vxpose.xlu0.c.b16.end [8/8] 0, 128
        %v1090 = vpop.trf.xlu0
        %v1091 = vpop.trf.xlu0
        %v1092 = vpop.trf.xlu0
        %v1093 = vpop.trf.xlu0
        %v1094 = vpop.trf.xlu0
        %v1095 = vpop.trf.xlu0
        %v1096 = vpop.trf.xlu0
        %v1097 = vpop.trf.xlu0
        %v1099 = vsel %vm991, %v1090, 0
        %v1102 = vsel %vm995, %v970, 0
        %1104 = vmatpush.bf16.msra.mxu0 0
        %1105 = vmatpush.bf16.msra.mxu0 0
        %1106 = vmatpush.bf16.msra.mxu0 0
        %1107 = vmatpush.bf16.msra.mxu0 0
        %1108 = vmatpush.bf16.msra.mxu0 0
        %1109 = vmatpush.bf16.msra.mxu0 0
        %1110 = vmatpush.bf16.msra.mxu0 0
        %1111 = vmatpush.bf16.msra.mxu0 %v1102
        %1112 = vmatmul.bf16.gmra.mxu0 %v1099
        %v1113 = vpop.f32.mrf.mxu0
        %v1114 = vadd.f32 0.0, %v1113
        %v1115 = vpop.f32.mrf.mxu0
        %1116 = vdwg.mxu0
        %v1117 = vmul.f32 %v1009, 0.35355338
        %v1118 = vmul.f32 %v1044, 0.35355338
        %v1119 = vmul.f32 %v1079, 0.35355338
        %v1120 = vmul.f32 %v1114, 0.35355338
        %v1121 = vsel %vm991, %v1117, -inf
        %1122 = vmax.xlane.f32.xlu0 %v1121
        %v1123 = vpop.xlane.xlu0 %1122
        %v1124 = vsel %vm991, %v1118, -inf
        %1125 = vmax.xlane.f32.xlu0 %v1124
        %v1126 = vpop.xlane.xlu0 %1125
        %v1127 = vsel %vm991, %v1119, -inf
        %1128 = vmax.xlane.f32.xlu0 %v1127
        %v1129 = vpop.xlane.xlu0 %1128
        %v1130 = vsel %vm991, %v1120, -inf
        %1131 = vmax.xlane.f32.xlu0 %v1130
        %v1132 = vpop.xlane.xlu0 %1131
        %v1133 = vsub.f32 %v1117, %v1123
        %v1134 = vsub.f32 %v1118, %v1126
        %v1135 = vsub.f32 %v1119, %v1129
        %v1136 = vsub.f32 %v1120, %v1132
        %v1137 = vmul.f32 %v1133, 1.442695
        %v1138 = vpow.pop %v1137
        %v1139 = vmul.f32 %v1134, 1.442695
        %v1140 = vpow.pop %v1139
        %v1141 = vmul.f32 %v1135, 1.442695
        %v1142 = vpow.pop %v1141
        %v1143 = vmul.f32 %v1136, 1.442695
        %v1144 = vpow.pop %v1143
        %v1145 = vsel %vm991, %v1138, 0.0
        %1146 = vadd.xlane.f32.xlu0 %v1145
        %v1147 = vpop.xlane.xlu0 %1146
        %v1148 = vsel %vm991, %v1140, 0.0
        %1149 = vadd.xlane.f32.xlu0 %v1148
        %v1150 = vpop.xlane.xlu0 %1149
        %v1151 = vsel %vm991, %v1142, 0.0
        %1152 = vadd.xlane.f32.xlu0 %v1151
        %v1153 = vpop.xlane.xlu0 %1152
        %v1154 = vsel %vm991, %v1144, 0.0
        %1155 = vadd.xlane.f32.xlu0 %v1154
        %v1156 = vpop.xlane.xlu0 %1155
        %v1157 = vrcp.pop %v1147
        %v1158 = vmul.f32 %v1147, %v1157
        %v1159 = vsub.f32 1.0, %v1158
        %v1160 = vmul.f32 %v1157, %v1159
        %v1161 = vadd.f32 %v1157, %v1160
        %vm1162 = vweird.f32 %v1147
        %vm1163 = vweird.f32 %v1157
        %vm1164 = vmor %vm1162, %vm1163
        %v1165 = vsel %vm1164, %v1157, %v1161
        %v1166 = vand.u32 2147483647, %v1147
        %vm1167 = vcmp.eq.f32.partialorder %v1166, 8.507059e+37
        %v1168 = vand.u32 %v1147, 2147483648
        %v1169 = vor.u32 1.1754944e-38, %v1168
        %v1170 = vsel %vm1167, %v1169, %v1165
        %v1171 = vmul.f32 %v1138, %v1170
        %v1172 = vrcp.pop %v1150
        %v1173 = vmul.f32 %v1150, %v1172
        %v1174 = vsub.f32 1.0, %v1173
        %v1175 = vmul.f32 %v1172, %v1174
        %v1176 = vadd.f32 %v1172, %v1175
        %vm1177 = vweird.f32 %v1150
        %vm1178 = vweird.f32 %v1172
        %vm1179 = vmor %vm1177, %vm1178
        %v1180 = vsel %vm1179, %v1172, %v1176
        %v1181 = vand.u32 2147483647, %v1150
        %vm1182 = vcmp.eq.f32.partialorder %v1181, 8.507059e+37
        %v1183 = vand.u32 %v1150, 2147483648
        %v1184 = vor.u32 1.1754944e-38, %v1183
        %v1185 = vsel %vm1182, %v1184, %v1180
        %v1186 = vmul.f32 %v1140, %v1185
        %v1187 = vrcp.pop %v1153
        %v1188 = vmul.f32 %v1153, %v1187
        %v1189 = vsub.f32 1.0, %v1188
        %v1190 = vmul.f32 %v1187, %v1189
        %v1191 = vadd.f32 %v1187, %v1190
        %vm1192 = vweird.f32 %v1153
        %vm1193 = vweird.f32 %v1187
        %vm1194 = vmor %vm1192, %vm1193
        %v1195 = vsel %vm1194, %v1187, %v1191
        %v1196 = vand.u32 2147483647, %v1153
        %vm1197 = vcmp.eq.f32.partialorder %v1196, 8.507059e+37
        %v1198 = vand.u32 %v1153, 2147483648
        %v1199 = vor.u32 1.1754944e-38, %v1198
        %v1200 = vsel %vm1197, %v1199, %v1195
        %v1201 = vmul.f32 %v1142, %v1200
        %v1202 = vrcp.pop %v1156
        %v1203 = vmul.f32 %v1156, %v1202
        %v1204 = vsub.f32 1.0, %v1203
        %v1205 = vmul.f32 %v1202, %v1204
        %v1206 = vadd.f32 %v1202, %v1205
        %vm1207 = vweird.f32 %v1156
        %vm1208 = vweird.f32 %v1202
        %vm1209 = vmor %vm1207, %vm1208
        %v1210 = vsel %vm1209, %v1202, %v1206
        %v1211 = vand.u32 2147483647, %v1156
        %vm1212 = vcmp.eq.f32.partialorder %v1211, 8.507059e+37
        %v1213 = vand.u32 %v1156, 2147483648
        %v1214 = vor.u32 1.1754944e-38, %v1213
        %v1215 = vsel %vm1212, %v1214, %v1210
        %v1216 = vmul.f32 %v1144, %v1215
        %v1217 = vpack.c.bf16 %v1171, %v1171
        %v1218 = vpack.c.bf16 %v1186, %v1186
        %v1219 = vpack.c.bf16 %v1201, %v1201
        %v1220 = vpack.c.bf16 %v1216, %v1216
        %v1222 = vsel %vm991, %v1217, 0
        %v1225 = vsel %vm991, %v971, 0
        %1227 = vmatpush.bf16.xpose.msra.mxu0 0
        %1228 = vmatpush.bf16.xpose.msra.mxu0 0
        %1229 = vmatpush.bf16.xpose.msra.mxu0 0
        %1230 = vmatpush.bf16.xpose.msra.mxu0 0
        %1231 = vmatpush.bf16.xpose.msra.mxu0 0
        %1232 = vmatpush.bf16.xpose.msra.mxu0 0
        %1233 = vmatpush.bf16.xpose.msra.mxu0 0
        %1234 = vmatpush.bf16.xpose.msra.mxu0 %v1225
        %1235 = vmatmul.bf16.gmra.mxu0 %v1222
        %v1236 = vpop.f32.mrf.mxu0
        %v1237 = vadd.f32 0.0, %v1236
        %v1238 = vpop.f32.mrf.mxu0
        %1239 = vdwg.mxu0
        %v1241 = vsel %vm991, %v1218, 0
        %v1244 = vsel %vm991, %v972, 0
        %1246 = vmatpush.bf16.xpose.msra.mxu0 0
        %1247 = vmatpush.bf16.xpose.msra.mxu0 0
        %1248 = vmatpush.bf16.xpose.msra.mxu0 0
        %1249 = vmatpush.bf16.xpose.msra.mxu0 0
        %1250 = vmatpush.bf16.xpose.msra.mxu0 0
        %1251 = vmatpush.bf16.xpose.msra.mxu0 0
        %1252 = vmatpush.bf16.xpose.msra.mxu0 0
        %1253 = vmatpush.bf16.xpose.msra.mxu0 %v1244
        %1254 = vmatmul.bf16.gmra.mxu0 %v1241
        %v1255 = vpop.f32.mrf.mxu0
        %v1256 = vadd.f32 0.0, %v1255
        %v1257 = vpop.f32.mrf.mxu0
        %1258 = vdwg.mxu0
        %v1260 = vsel %vm991, %v1219, 0
        %v1263 = vsel %vm991, %v973, 0
        %1265 = vmatpush.bf16.xpose.msra.mxu0 0
        %1266 = vmatpush.bf16.xpose.msra.mxu0 0
        %1267 = vmatpush.bf16.xpose.msra.mxu0 0
        %1268 = vmatpush.bf16.xpose.msra.mxu0 0
        %1269 = vmatpush.bf16.xpose.msra.mxu0 0
        %1270 = vmatpush.bf16.xpose.msra.mxu0 0
        %1271 = vmatpush.bf16.xpose.msra.mxu0 0
        %1272 = vmatpush.bf16.xpose.msra.mxu0 %v1263
        %1273 = vmatmul.bf16.gmra.mxu0 %v1260
        %v1274 = vpop.f32.mrf.mxu0
        %v1275 = vadd.f32 0.0, %v1274
        %v1276 = vpop.f32.mrf.mxu0
        %1277 = vdwg.mxu0
        %v1279 = vsel %vm991, %v1220, 0
        %v1282 = vsel %vm991, %v974, 0
        %1284 = vmatpush.bf16.xpose.msra.mxu0 0
        %1285 = vmatpush.bf16.xpose.msra.mxu0 0
        %1286 = vmatpush.bf16.xpose.msra.mxu0 0
        %1287 = vmatpush.bf16.xpose.msra.mxu0 0
        %1288 = vmatpush.bf16.xpose.msra.mxu0 0
        %1289 = vmatpush.bf16.xpose.msra.mxu0 0
        %1290 = vmatpush.bf16.xpose.msra.mxu0 0
        %1291 = vmatpush.bf16.xpose.msra.mxu0 %v1282
        %1292 = vmatmul.bf16.gmra.mxu0 %v1279
        %v1293 = vpop.f32.mrf.mxu0
        %v1294 = vadd.f32 0.0, %v1293
        %v1295 = vpop.f32.mrf.mxu0
        %1296 = vdwg.mxu0
        %v1297 = vpack.c.bf16 %v1237, %v1237
        %v1298 = vpack.c.bf16 %v1256, %v1256
        %v1299 = vpack.c.bf16 %v1275, %v1275
        %v1300 = vpack.c.bf16 %v1294, %v1294
        %v1301 = vld [vmem:[%s708] sm:$0xf]
        %v1302 = vld [vmem:[%s708 + $0x4] sm:$0xf]
        %v1303 = vld [vmem:[%s708 + $0x8] sm:$0xf]
        %v1304 = vld [vmem:[%s708 + $0xc] sm:$0xf]
        %v1306 = vsel %vm991, %v1297, 0
        %v1309 = vsel %vm995, %v1301, 0
        %1311 = vmatpush.bf16.msra.mxu0 0
        %1312 = vmatpush.bf16.msra.mxu0 0
        %1313 = vmatpush.bf16.msra.mxu0 0
        %1314 = vmatpush.bf16.msra.mxu0 0
        %1315 = vmatpush.bf16.msra.mxu0 0
        %1316 = vmatpush.bf16.msra.mxu0 0
        %1317 = vmatpush.bf16.msra.mxu0 0
        %1318 = vmatpush.bf16.msra.mxu0 %v1309
        %1319 = vmatmul.bf16.gmra.mxu0 %v1306
        %v1320 = vpop.f32.mrf.mxu0
        %v1321 = vadd.f32 0.0, %v1320
        %v1322 = vpop.f32.mrf.mxu0
        %1323 = vdwg.mxu0
        %v1325 = vsel %vm991, %v1298, 0
        %v1328 = vsel %vm995, %v1302, 0
        %1330 = vmatpush.bf16.msra.mxu0 0
        %1331 = vmatpush.bf16.msra.mxu0 0
        %1332 = vmatpush.bf16.msra.mxu0 0
        %1333 = vmatpush.bf16.msra.mxu0 0
        %1334 = vmatpush.bf16.msra.mxu0 0
        %1335 = vmatpush.bf16.msra.mxu0 0
        %1336 = vmatpush.bf16.msra.mxu0 0
        %1337 = vmatpush.bf16.msra.mxu0 %v1328
        %1338 = vmatmul.bf16.gmra.mxu0 %v1325
        %v1339 = vpop.f32.mrf.mxu0
        %v1340 = vadd.f32 0.0, %v1339
        %v1341 = vpop.f32.mrf.mxu0
        %1342 = vdwg.mxu0
        %v1344 = vsel %vm991, %v1299, 0
        %v1347 = vsel %vm995, %v1303, 0
        %1349 = vmatpush.bf16.msra.mxu0 0
        %1350 = vmatpush.bf16.msra.mxu0 0
        %1351 = vmatpush.bf16.msra.mxu0 0
        %1352 = vmatpush.bf16.msra.mxu0 0
        %1353 = vmatpush.bf16.msra.mxu0 0
        %1354 = vmatpush.bf16.msra.mxu0 0
        %1355 = vmatpush.bf16.msra.mxu0 0
        %1356 = vmatpush.bf16.msra.mxu0 %v1347
        %1357 = vmatmul.bf16.gmra.mxu0 %v1344
        %v1358 = vpop.f32.mrf.mxu0
        %v1359 = vadd.f32 0.0, %v1358
        %v1360 = vpop.f32.mrf.mxu0
        %1361 = vdwg.mxu0
        %v1363 = vsel %vm991, %v1300, 0
        %v1366 = vsel %vm995, %v1304, 0
        %1368 = vmatpush.bf16.msra.mxu0 0
        %1369 = vmatpush.bf16.msra.mxu0 0
        %1370 = vmatpush.bf16.msra.mxu0 0
        %1371 = vmatpush.bf16.msra.mxu0 0
        %1372 = vmatpush.bf16.msra.mxu0 0
        %1373 = vmatpush.bf16.msra.mxu0 0
        %1374 = vmatpush.bf16.msra.mxu0 0
        %1375 = vmatpush.bf16.msra.mxu0 %v1366
        %1376 = vmatmul.bf16.gmra.mxu0 %v1363
        %v1377 = vpop.f32.mrf.mxu0
        %v1378 = vadd.f32 0.0, %v1377
        %v1379 = vpop.f32.mrf.mxu0
        %1380 = vdwg.mxu0
        %v1381 = vsel %vm905, %v1321, 0.0
        %v1382 = vsel %vm905, %v1340, 0.0
        %v1383 = vadd.f32 %v1381, %v1382
        %v1384 = vsel %vm905, %v1359, 0.0
        %v1385 = vadd.f32 %v1383, %v1384
        %v1386 = vsel %vm905, %v1378, 0.0
        %v1387 = vadd.f32 %v1385, %v1386
        %v1388 = vld [vmem:[%s711] sm:$0x1]
        %v1390 = vperm.slane %v1388, 0
        %v1392 = vadd.f32 %v1387, %v1390
        %v1393 = vadd.f32 %v756, %v1392
        %v1394 = vld [vmem:[%s714] sm:$0x1]
        %v1395 = vld [vmem:[%s717] sm:$0x1]
        %v1396 = vsel %vm905, %v1393, 0.0
        %1397 = vadd.xlane.f32.xlu0 %v1396
        %v1398 = vpop.xlane.xlu0 %1397
        %v1399 = vrcp.pop 32.0
        %v1400 = vmul.f32 32.0, %v1399
        %v1401 = vsub.f32 1.0, %v1400
        %v1402 = vmul.f32 %v1399, %v1401
        %v1403 = vadd.f32 %v1399, %v1402
        %vm1404 = vweird.f32 %v1399
        %v1405 = vsel %vm1404, %v1399, %v1403
        %v1406 = vmul.f32 %v1398, %v1405
        %v1407 = vsub.f32 %v1393, %v1406
        %v1408 = vmul.f32 %v1407, %v1407
        %v1409 = vsel %vm905, %v1408, 0.0
        %1410 = vadd.xlane.f32.xlu0 %v1409
        %v1411 = vpop.xlane.xlu0 %1410
        %v1412 = vmul.f32 %v1411, %v1405
        %v1413 = vadd.f32 %v1412, 1e-05
        %v1414 = vrsqrt.pop %v1413
        %v1415 = vmul.f32 %v1414, %v1413
        %v1416 = vmul.f32 %v1415, %v1414
        %v1417 = vmul.f32 0.5, %v1416
        %v1418 = vsub.f32 1.5, %v1417
        %v1419 = vmul.f32 %v1414, %v1418
        %vm1420 = vweird.f32 %v1413
        %vm1421 = vweird.f32 %v1414
        %vm1422 = vmor %vm1420, %vm1421
        %v1423 = vsel %vm1422, %v1414, %v1419
        %v1424 = vmul.f32 %v1407, %v1423
        %v1426 = vperm.slane %v1394, 0
        %v1428 = vmul.f32 %v1424, %v1426
        %v1430 = vperm.slane %v1395, 0
        %v1432 = vadd.f32 %v1428, %v1430
        %v1433 = vpack.c.bf16 %v1432, %v1432
        %v1434 = vld [vmem:[%s722] sm:$0xf]
        %v1435 = vld [vmem:[%s722 + $0x4] sm:$0xf]
        %v1436 = vld [vmem:[%s722 + $0x8] sm:$0xf]
        %v1437 = vld [vmem:[%s722 + $0xc] sm:$0xf]
        %v1438 = vld [vmem:[%s725] sm:$0x1]
        %v1440 = vperm.slane %v1438, 0
        %v1446 = vunpack.c.l.b16 %v1434
        %v1447 = vunpack.c.l.b16 %v1435
        %v1448 = vunpack.c.l.b16 %v1436
        %v1449 = vunpack.c.l.b16 %v1437
        %v1450 = vpack.c.b16 %v1447, %v1446
        %v1451 = vpack.c.b16 %v1449, %v1448
        %v1455 = vsel %vm905, %v1433, 0
        %1457 = vmatpush.bf16.msra.mxu0 0
        %1458 = vmatpush.bf16.msra.mxu0 0
        %1459 = vmatpush.bf16.msra.mxu0 0
        %1460 = vmatpush.bf16.msra.mxu0 0
        %1461 = vmatpush.bf16.msra.mxu0 0
        %1462 = vmatpush.bf16.msra.mxu0 0
        %1463 = vmatpush.bf16.msra.mxu0 %v1451
        %1464 = vmatpush.bf16.msra.mxu0 %v1450
        %1465 = vmatmul.bf16.gmra.mxu0 %v1455
        %v1466 = vpop.f32.mrf.mxu0
        %v1467 = vadd.f32 %v1440, %v1466
        %v1468 = vpop.f32.mrf.mxu0
        %1469 = vdwg.mxu0
        %v1470 = vmax.f32 %v1467, 0.0
        %v1471 = vpack.c.bf16 %v1470, %v1470
        %v1472 = vld [vmem:[%s730] sm:$0xf]
        %v1473 = vld [vmem:[%s730 + $0x4] sm:$0xf]
        %v1474 = vld [vmem:[%s730 + $0x8] sm:$0xf]
        %v1475 = vld [vmem:[%s730 + $0xc] sm:$0xf]
        %v1476 = vld [vmem:[%s730 + $0x10] sm:$0xf]
        %v1477 = vld [vmem:[%s730 + $0x14] sm:$0xf]
        %v1478 = vld [vmem:[%s730 + $0x18] sm:$0xf]
        %v1479 = vld [vmem:[%s730 + $0x1c] sm:$0xf]
        %v1480 = vld [vmem:[%s733] sm:$0x1]
        %v1482 = vperm.slane %v1480, 0
        %v1492 = vunpack.c.l.b16 %v1472
        %v1493 = vunpack.c.l.b16 %v1473
        %v1494 = vunpack.c.l.b16 %v1474
        %v1495 = vunpack.c.l.b16 %v1475
        %v1496 = vunpack.c.l.b16 %v1476
        %v1497 = vunpack.c.l.b16 %v1477
        %v1498 = vunpack.c.l.b16 %v1478
        %v1499 = vunpack.c.l.b16 %v1479
        %v1500 = vpack.c.b16 %v1493, %v1492
        %v1501 = vpack.c.b16 %v1495, %v1494
        %v1502 = vpack.c.b16 %v1497, %v1496
        %v1503 = vpack.c.b16 %v1499, %v1498
        %vm1508 = vcmask 523264
        %v1510 = vsel %vm1508, %v1471, 0
        %1512 = vmatpush.bf16.msra.mxu0 0
        %1513 = vmatpush.bf16.msra.mxu0 0
        %1514 = vmatpush.bf16.msra.mxu0 0
        %1515 = vmatpush.bf16.msra.mxu0 0
        %1516 = vmatpush.bf16.msra.mxu0 %v1503
        %1517 = vmatpush.bf16.msra.mxu0 %v1502
        %1518 = vmatpush.bf16.msra.mxu0 %v1501
        %1519 = vmatpush.bf16.msra.mxu0 %v1500
        %1520 = vmatmul.bf16.gmra.mxu0 %v1510
        %v1521 = vpop.f32.mrf.mxu0
        %v1522 = vadd.f32 %v1482, %v1521
        %v1523 = vpop.f32.mrf.mxu0
        %1524 = vdwg.mxu0
        %v1525 = vadd.f32 %v1432, %v1522
        %v1526 = vld [vmem:[%s736] sm:$0x1]
        %v1527 = vld [vmem:[%s739] sm:$0x1]
        %v1528 = vsel %vm905, %v1525, 0.0
        %1529 = vadd.xlane.f32.xlu0 %v1528
        %v1530 = vpop.xlane.xlu0 %1529
        %v1531 = vmul.f32 %v1530, %v1405
        %v1532 = vsub.f32 %v1525, %v1531
        %v1533 = vmul.f32 %v1532, %v1532
        %v1534 = vsel %vm905, %v1533, 0.0
        %1535 = vadd.xlane.f32.xlu0 %v1534
        %v1536 = vpop.xlane.xlu0 %1535
        %v1537 = vmul.f32 %v1536, %v1405
        %v1538 = vadd.f32 %v1537, 1e-05
        %v1539 = vrsqrt.pop %v1538
        %v1540 = vmul.f32 %v1539, %v1538
        %v1541 = vmul.f32 %v1540, %v1539
        %v1542 = vmul.f32 0.5, %v1541
        %v1543 = vsub.f32 1.5, %v1542
        %v1544 = vmul.f32 %v1539, %v1543
        %vm1545 = vweird.f32 %v1538
        %vm1546 = vweird.f32 %v1539
        %vm1547 = vmor %vm1545, %vm1546
        %v1548 = vsel %vm1547, %v1539, %v1544
        %v1549 = vmul.f32 %v1532, %v1548
        %v1551 = vperm.slane %v1526, 0
        %v1553 = vmul.f32 %v1549, %v1551
        %v1555 = vperm.slane %v1527, 0
        %v1557 = vadd.f32 %v1553, %v1555
        %1558 = vst.msk [vmem:[#allocation2] sm:$0xff] %vm905, %v1557
        %1559 = vst.msk [vmem:[%s747] sm:$0xff] %vm905, %v1557
        %p1560 = scmp.eq.s32.totalorder %s36, 1
        // Predicated region
        $region85: #{encoder_block_forward.1} parent=79 // pred_check
          %p1561 = pneg %p1560
        $region86: #{encoder_block_forward.1} parent=79 // pred_check_branch
          %1563 = sbr.rel (%p1561) target = $region88
        $region87: #{encoder_block_forward.1} parent=79 // pred_region
          %v1564 = vld [vmem:[%s13] sm:$0x1]
          %v1565 = vld [vmem:[%s14] sm:$0x1]
          %v1566 = vsel %vm905, %v1557, 0.0
          %1567 = vadd.xlane.f32.xlu0 %v1566
          %v1568 = vpop.xlane.xlu0 %1567
          %v1569 = vmul.f32 %v1568, %v1405
          %v1570 = vsub.f32 %v1557, %v1569
          %v1571 = vmul.f32 %v1570, %v1570
          %v1572 = vsel %vm905, %v1571, 0.0
          %1573 = vadd.xlane.f32.xlu0 %v1572
          %v1574 = vpop.xlane.xlu0 %1573
          %v1575 = vmul.f32 %v1574, %v1405
          %v1576 = vadd.f32 %v1575, 1e-05
          %v1577 = vrsqrt.pop %v1576
          %v1578 = vmul.f32 %v1577, %v1576
          %v1579 = vmul.f32 %v1578, %v1577
          %v1580 = vmul.f32 0.5, %v1579
          %v1581 = vsub.f32 1.5, %v1580
          %v1582 = vmul.f32 %v1577, %v1581
          %vm1583 = vweird.f32 %v1576
          %vm1584 = vweird.f32 %v1577
          %vm1585 = vmor %vm1583, %vm1584
          %v1586 = vsel %vm1585, %v1577, %v1582
          %v1587 = vmul.f32 %v1570, %v1586
          %v1589 = vperm.slane %v1564, 0
          %v1591 = vmul.f32 %v1587, %v1589
          %v1593 = vperm.slane %v1565, 0
          %v1595 = vadd.f32 %v1591, %v1593
          %1596 = vst.msk [vmem:[%s679] sm:$0xff] %vm905, %v1595
        $region88: #{encoder_block_forward.1} parent=79 // pred_fallthru
          _
        %s1597 = sand.u32 %s431, 1
        %s1598 = scalar_lea.sflag [#allocation4], %s1597
        %s1599 = sand.u32 %s431, 1
        %s1600 = smul.addr %s1599, 8
        %s1601 = scalar_lea.vmem [#allocation3], %s1600
        %p1602 = scmp.lt.s32.totalorder %s36, 1
        %s1603 = scalar_select %p1602, %s36, 1
        %p1604 = scmp.lt.s32.totalorder %s35, 1
        %s1605 = scalar_select %p1604, %s35, 1
        %s1606 = smul.addr %s1603, 2
        %s1607 = sadd.s32 %s1605, %s1606
        %s1608 = smul.addr %s1607, 8
        %s1609 = scalar_lea.vmem %s16, %s1608
        // Predicated region
        $region89: #{encoder_block_forward.1} parent=79 // pred_check
          %p1610 = pneg %p441
        $region90: #{encoder_block_forward.1} parent=79 // pred_check_branch
          %1612 = sbr.rel (%p1610) target = $region92
        $region91: #{encoder_block_forward.1} parent=79 // pred_region
          %1614 = vsyncadd %s1598, 0
          %s1615 = smul.addr %s35, 8
          %s1616 = scalar_lea.hbm %s15, %s1615
          %s1618 = sshll.u32 %s1601, 4
          %s1619 = int_to_ptr.vmem [resolvable:$true] %s1618
          %s1620 = sshll.u32 %s1616, 4
          %s1621 = int_to_ptr.hbm [resolvable:$true] %s1620
          %1623 = dma.vmem_to_hbm [thread:$0]  %s1619, 128, %s1621, %s1598
        $region92: #{encoder_block_forward.1} parent=79 // pred_fallthru
          _
        // Predicated region
        $region93: #{encoder_block_forward.1} parent=79 // pred_check
          %p1624 = pneg %p469
        $region94: #{encoder_block_forward.1} parent=79 // pred_check_branch
          %1626 = sbr.rel (%p1624) target = $region96
        $region95: #{encoder_block_forward.1} parent=79 // pred_region
          _
        $region96: #{encoder_block_forward.1} parent=79 // pred_fallthru
          _
      $region80: #{encoder_block_forward.1} parent=5 // pred_fallthru
        _
      %p1627 = scmp.le.s32.totalorder 2, %s26
      // Predicated region
      $region97: #{encoder_block_forward.1} parent=5 // pred_check
        %p1628 = pneg %p1627
      $region98: #{encoder_block_forward.1} parent=5 // pred_check_branch
        %1630 = sbr.rel (%p1628) target = $region100
      $region99: #{encoder_block_forward.1} parent=5 // pred_region
        %s1631 = ssub.s32 %s26, 2
        // Predicated region
        $region101: #{encoder_block_forward.1} parent=99 // pred_check
          %p1632 = pneg %p447
        $region102: #{encoder_block_forward.1} parent=99 // pred_check_branch
          %1634 = sbr.rel (%p1632) target = $region104
        $region103: #{encoder_block_forward.1} parent=99 // pred_region
          %s1635 = sand.u32 %s432, 1
          %s1636 = scalar_lea.sflag [#allocation4], %s1635
          %s1637 = sand.u32 %s432, 1
          %s1638 = smul.addr %s1637, 8
          %s1639 = scalar_lea.vmem [#allocation3], %s1638
          %1641 = dma.done %s1636, 128
        $region104: #{encoder_block_forward.1} parent=99 // pred_fallthru
          _
        // Predicated region
        $region105: #{encoder_block_forward.1} parent=99 // pred_check
          %p1642 = pneg %p475
        $region106: #{encoder_block_forward.1} parent=99 // pred_check_branch
          %1644 = sbr.rel (%p1642) target = $region108
        $region107: #{encoder_block_forward.1} parent=99 // pred_region
          %p1645 = scmp.lt.s32.totalorder %s38, 1
          %s1646 = scalar_select %p1645, %s38, 1
          %p1647 = scmp.lt.s32.totalorder %s37, 1
          %s1648 = scalar_select %p1647, %s37, 1
          %s1649 = smul.addr %s1646, 2
          %s1650 = sadd.s32 %s1648, %s1649
          %s1651 = smul.addr %s1650, 8
          %s1652 = scalar_lea.vmem %s16, %s1651
        $region108: #{encoder_block_forward.1} parent=99 // pred_fallthru
          _
      $region100: #{encoder_block_forward.1} parent=5 // pred_fallthru
        _
    $region6: #{encoder_block_forward.1} parent=1 // loop_footer
      %s30 = sadd.s32 1, %s26
    $region7: #{encoder_block_forward.1} parent=1 // loop_footer_branch
      %25 = sbr.rel target = $region3
    $region8: #{encoder_block_forward.1} parent=1 // loop_exit
      _
    %1653 = vsyncpa [#allocation4], 1
    %s1654 = scalar_lea.sflag [#allocation4], 1
    %1655 = vsyncpa %s1654, 1

</llo_original>
